<compile_context>
chip_gen: v5e
topology: v5e:2x2
jax: 0.10.0
libtpu: 0.0.40
codegen_flags: <defaults>
</compile_context>

<pallas_src>
import numpy as np
import jax
import jax.numpy as jnp
from jax import lax
from jax.experimental import pallas as pl
from jax.experimental.pallas import tpu as pltpu


# ------------------------------ fused kernel ---------------------------------

def _make_fused_kernel(dims):
    (K2, W1, FLAT1, Pw1, U) = dims
    CM_W = FLAT1 - W1 - 1            # width of the full 2x2-max slab after conv1
    M1_W = U - 2                     # pool2 horizontal-pair max width
    M2_W = U - 2 - 2 * Pw1           # pool2 full 2x2 max width

    def kernel(p_ref, w1_ref, w2_ref, s1_ref, s2_ref, o_ref):
        patches = p_ref[0]                                   # (Kfold, FLAT1)

        # ---- conv1 + tanh: one lane-dense matmul (channels padded to 8) ------
        y1 = jnp.tanh(jnp.dot(w1_ref[...], patches,
                              preferred_element_type=jnp.float32))   # (8, FLAT1)

        # ---- maxpool 2x2 on the flat (h*W1 + w) lane space --------------------
        rm = jnp.maximum(y1[:, :FLAT1 - W1], y1[:, W1:])              # rows h / h+1
        cm = jnp.maximum(rm[:, :CM_W], rm[:, 1:CM_W + 1])             # cols w / w+1
        # stride-2 compaction to the (Ph1*Pw1) pooled grid: ONE selection matmul
        p1 = jnp.dot(cm, s1_ref[...],
                     preferred_element_type=jnp.float32)              # (8, Ph1*Pw1)

        # ---- conv2 (k=5, stride 2) + tanh as ONE K-folded matmul --------------
        # im2col rows = (kh, kw, ci_pad) taps, each a static contiguous lane
        # slice of p1; columns = over-computed flat output u = 2*Pw1*h2 + 2*w2.
        x2 = jnp.concatenate(
            [p1[:, kh * Pw1 + kw: kh * Pw1 + kw + U]
             for kh in range(K2) for kw in range(K2)], axis=0)        # (200, U)
        y2 = jnp.tanh(jnp.dot(w2_ref[...], x2,
                              preferred_element_type=jnp.float32))    # (Cout2, U)

        # ---- maxpool 2x2 on the conv2 grid (valid lanes: u = 2*Pw1*h2 + 2*w2) -
        m1 = jnp.maximum(y2[:, :M1_W], y2[:, 2:M1_W + 2])             # +0 / +2
        m2 = jnp.maximum(m1[:, :M2_W], m1[:, 2 * Pw1:2 * Pw1 + M2_W]) # +0 / +2*Pw1
        # pick the Ph2*Pw2 valid positions with one tiny selection matmul and
        # store the whole sample result with a single lane-dense store.
        out = jnp.dot(m2, s2_ref[...],
                      preferred_element_type=jnp.float32)             # (Cout2, 9)
        o_ref[0] = out

    return kernel


# ------------------------------ wrapper --------------------------------------

@jax.jit
def cnn_forward(ob_nchw, w1_oihw, w2_oihw):
    """Pallas implementation of CNN.forward; returns the flattened NCHW output."""
    ob = ob_nchw.astype(jnp.float32)
    w1 = w1_oihw.astype(jnp.float32)          # (Cout1, Cin, 3, 3)
    w2 = w2_oihw.astype(jnp.float32)          # (Cout2, Cout1, 5, 5)

    N, Cin, H, W = ob.shape
    Cout1, _, K1, _ = w1.shape
    Cout2, _, K2, _ = w2.shape

    H1, W1 = H - K1 + 1, W - K1 + 1                         # conv1 output
    assert H1 % 2 == 0 and W1 % 2 == 0, "even conv1 output required for MaxPool2d(2,2)"
    Ph1, Pw1 = H1 // 2, W1 // 2                             # pool1 output
    H2, W2o = (Ph1 - K2) // 2 + 1, (Pw1 - K2) // 2 + 1      # conv2 output (stride 2)
    assert H2 % 2 == 0 and W2o % 2 == 0, "even conv2 output required for MaxPool2d(2,2)"
    Ph2, Pw2 = H2 // 2, W2o // 2                            # pool2 output

    Kfold = Cin * K1 * K1
    CP1 = ((Cout1 + 7) // 8) * 8                            # pad conv1 channels to a sublane tile
    FLAT1 = H1 * W1
    U = 2 * Pw1 * (H2 - 1) + 2 * (W2o - 1) + 1              # over-computed conv2 width
    CM_W = FLAT1 - W1 - 1
    M2_W = U - 2 - 2 * Pw1

    # conv1 im2col patches (N, Kfold, H1*W1); k ordered (ci, kh, kw) so it
    # matches w1.reshape(Cout1, Kfold). One fused XLA gather, ~100 KB total.
    pieces = [ob[:, ci, kh:kh + H1, kw:kw + W1].reshape(N, 1, FLAT1)
              for ci in range(Cin) for kh in range(K1) for kw in range(K1)]
    patches = jnp.concatenate(pieces, axis=1)               # (N, Kfold, FLAT1)

    # 2-D, lane-aligned weights (zero-padded extra channels contribute nothing).
    w1p = jnp.zeros((CP1, Kfold), jnp.float32).at[:Cout1].set(w1.reshape(Cout1, Kfold))
    w2t = jnp.transpose(w2, (0, 2, 3, 1))                   # (co, kh, kw, ci)
    w2t = jnp.pad(w2t, ((0, 0), (0, 0), (0, 0), (0, CP1 - Cout1)))
    w2p = w2t.reshape(Cout2, K2 * K2 * CP1)                 # (Cout2, 200)

    # Constant 0/1 selection matrices (built once at trace time, passed in).
    j1 = np.arange(Ph1 * Pw1)
    s1 = np.zeros((CM_W, Ph1 * Pw1), np.float32)
    s1[2 * W1 * (j1 // Pw1) + 2 * (j1 % Pw1), j1] = 1.0     # pool1 stride-2 compaction
    j2 = np.arange(Ph2 * Pw2)
    s2 = np.zeros((M2_W, Ph2 * Pw2), np.float32)
    s2[4 * Pw1 * (j2 // Pw2) + 4 * (j2 % Pw2), j2] = 1.0    # pool2 valid-lane pick
    s1 = jnp.asarray(s1)
    s2 = jnp.asarray(s2)

    kernel = _make_fused_kernel((K2, W1, FLAT1, Pw1, U))

    out = pl.pallas_call(
        kernel,
        out_shape=jax.ShapeDtypeStruct((N, Cout2, Ph2 * Pw2), jnp.float32),
        grid=(N,),
        in_specs=[
            pl.BlockSpec((1, Kfold, FLAT1), lambda n: (n, 0, 0)),
            pl.BlockSpec((CP1, Kfold), lambda n: (0, 0)),
            pl.BlockSpec((Cout2, K2 * K2 * CP1), lambda n: (0, 0)),
            pl.BlockSpec((CM_W, Ph1 * Pw1), lambda n: (0, 0)),
            pl.BlockSpec((M2_W, Ph2 * Pw2), lambda n: (0, 0)),
        ],
        out_specs=pl.BlockSpec((1, Cout2, Ph2 * Pw2), lambda n: (n, 0, 0)),
        compiler_params=pltpu.CompilerParams(
            dimension_semantics=("parallel",)),
    )(patches, w1p, w2p, s1, s2)

    # (N, C, h*w) -> flat: pure metadata reshape, matches torch's x2.view(-1).
    return out.reshape(-1)


# ------------------------------ pure-JAX reference ----------------------------

def reference_forward(ob_nchw, w1_oihw, w2_oihw):
    x = ob_nchw.astype(jnp.float32)
    dn = ('NCHW', 'OIHW', 'NCHW')
    y1 = jnp.tanh(lax.conv_general_dilated(x, w1_oihw.astype(jnp.float32),
                                           (1, 1), 'VALID', dimension_numbers=dn))
    p1 = lax.reduce_window(y1, -jnp.inf, lax.max, (1, 1, 2, 2), (1, 1, 2, 2), 'VALID')
    y2 = jnp.tanh(lax.conv_general_dilated(p1, w2_oihw.astype(jnp.float32),
                                           (2, 2), 'VALID', dimension_numbers=dn))
    p2 = lax.reduce_window(y2, -jnp.inf, lax.max, (1, 1, 2, 2), (1, 1, 2, 2), 'VALID')
    return p2.reshape(-1)


# ----------------------------------- main -------------------------------------

if __name__ == "__main__":
    key = jax.random.PRNGKey(0)
    kx, k1, k2 = jax.random.split(key, 3)

    N, Cin, H, W = 2, 3, 32, 32
    ob = jax.random.uniform(kx, (N, Cin, H, W), jnp.float32)          # fake observation
    # Deterministic synthetic weights (PyTorch OIHW shapes from __init__).
    w1 = jax.random.normal(k1, (6, Cin, 3, 3), jnp.float32) * (1.0 / (Cin * 9) ** 0.5)
    w2 = jax.random.normal(k2, (8, 6, 5, 5), jnp.float32) * (1.0 / (6 * 25) ** 0.5)

    out = jax.block_until_ready(cnn_forward(ob, w1, w2))
    ref = jax.block_until_ready(reference_forward(ob, w1, w2))

    assert out.shape == ref.shape == (N * 8 * 3 * 3,), (out.shape, ref.shape)
    max_err = float(jnp.max(jnp.abs(out - ref)))
    assert jnp.allclose(out, ref, atol=2e-4, rtol=2e-4), max_err
    print("KERNEL_OK")
</pallas_src>

<mosaic_0001>
module attributes {stable_mosaic.version = 11 : i64} {
  func.func @kernel(%arg0: i32, %arg1: memref<1x27x900xf32, #tpu.memory_space<vmem>>, %arg2: memref<8x27xf32, #tpu.memory_space<vmem>>, %arg3: memref<8x200xf32, #tpu.memory_space<vmem>>, %arg4: memref<869x225xf32, #tpu.memory_space<vmem>>, %arg5: memref<129x9xf32, #tpu.memory_space<vmem>>, %arg6: memref<1x8x9xf32, #tpu.memory_space<vmem>>) attributes {dimension_semantics = [#tpu.dimension_semantics<parallel>], iteration_bounds = array<i64: 2>, scalar_prefetch = 0 : i64, scratch_operands = 0 : i64, tpu.core_type = #tpu.core_type<tc>, window_params = [{transform_indices = @transform_0, window_bounds = array<i64: 1, 27, 900>}, {pipeline_mode = #tpu.pipeline_mode<synchronous>, transform_indices = @transform_1, window_bounds = array<i64: 8, 27>}, {pipeline_mode = #tpu.pipeline_mode<synchronous>, transform_indices = @transform_2, window_bounds = array<i64: 8, 200>}, {pipeline_mode = #tpu.pipeline_mode<synchronous>, transform_indices = @transform_3, window_bounds = array<i64: 869, 225>}, {pipeline_mode = #tpu.pipeline_mode<synchronous>, transform_indices = @transform_4, window_bounds = array<i64: 129, 9>}, {transform_indices = @transform_5, window_bounds = array<i64: 1, 8, 9>}]} {
    %c0 = arith.constant 0 : index
    %c0_0 = arith.constant 0 : index
    %c0_1 = arith.constant 0 : index
    %0 = vector.load %arg1[%c0, %c0_0, %c0_1] : memref<1x27x900xf32, #tpu.memory_space<vmem>>, vector<1x27x900xf32>
    %1 = vector.shape_cast %0 : vector<1x27x900xf32> to vector<27x900xf32>
    %c0_2 = arith.constant 0 : index
    %c0_3 = arith.constant 0 : index
    %2 = vector.load %arg2[%c0_2, %c0_3] : memref<8x27xf32, #tpu.memory_space<vmem>>, vector<8x27xf32>
    %cst = arith.constant dense<0.000000e+00> : vector<8x900xf32>
    %3 = tpu.matmul %2, %1, %cst {dimension_numbers = #tpu.dot_dimension_numbers<[1], [0], [0], [1], [0, 0, 1, 1], [], []>} : vector<8x27xf32>, vector<27x900xf32>, vector<8x900xf32> -> vector<8x900xf32>
    %4 = math.tanh %3 : vector<8x900xf32>
    %5 = vector.extract_strided_slice %4 {offsets = [0, 0], sizes = [8, 870], strides = [1, 1]} : vector<8x900xf32> to vector<8x870xf32>
    %6 = vector.extract_strided_slice %4 {offsets = [0, 30], sizes = [8, 870], strides = [1, 1]} : vector<8x900xf32> to vector<8x870xf32>
    %7 = arith.maximumf %5, %6 : vector<8x870xf32>
    %8 = vector.extract_strided_slice %7 {offsets = [0, 0], sizes = [8, 869], strides = [1, 1]} : vector<8x870xf32> to vector<8x869xf32>
    %9 = vector.extract_strided_slice %7 {offsets = [0, 1], sizes = [8, 869], strides = [1, 1]} : vector<8x870xf32> to vector<8x869xf32>
    %10 = arith.maximumf %8, %9 : vector<8x869xf32>
    %c0_4 = arith.constant 0 : index
    %c0_5 = arith.constant 0 : index
    %11 = vector.load %arg4[%c0_4, %c0_5] : memref<869x225xf32, #tpu.memory_space<vmem>>, vector<869x225xf32>
    %cst_6 = arith.constant dense<0.000000e+00> : vector<8x225xf32>
    %12 = tpu.matmul %10, %11, %cst_6 {dimension_numbers = #tpu.dot_dimension_numbers<[1], [0], [0], [1], [0, 0, 1, 1], [], []>} : vector<8x869xf32>, vector<869x225xf32>, vector<8x225xf32> -> vector<8x225xf32>
    %13 = vector.extract_strided_slice %12 {offsets = [0, 0], sizes = [8, 161], strides = [1, 1]} : vector<8x225xf32> to vector<8x161xf32>
    %14 = vector.extract_strided_slice %12 {offsets = [0, 1], sizes = [8, 161], strides = [1, 1]} : vector<8x225xf32> to vector<8x161xf32>
    %15 = vector.extract_strided_slice %12 {offsets = [0, 2], sizes = [8, 161], strides = [1, 1]} : vector<8x225xf32> to vector<8x161xf32>
    %16 = vector.extract_strided_slice %12 {offsets = [0, 3], sizes = [8, 161], strides = [1, 1]} : vector<8x225xf32> to vector<8x161xf32>
    %17 = vector.extract_strided_slice %12 {offsets = [0, 4], sizes = [8, 161], strides = [1, 1]} : vector<8x225xf32> to vector<8x161xf32>
    %18 = vector.extract_strided_slice %12 {offsets = [0, 15], sizes = [8, 161], strides = [1, 1]} : vector<8x225xf32> to vector<8x161xf32>
    %19 = vector.extract_strided_slice %12 {offsets = [0, 16], sizes = [8, 161], strides = [1, 1]} : vector<8x225xf32> to vector<8x161xf32>
    %20 = vector.extract_strided_slice %12 {offsets = [0, 17], sizes = [8, 161], strides = [1, 1]} : vector<8x225xf32> to vector<8x161xf32>
    %21 = vector.extract_strided_slice %12 {offsets = [0, 18], sizes = [8, 161], strides = [1, 1]} : vector<8x225xf32> to vector<8x161xf32>
    %22 = vector.extract_strided_slice %12 {offsets = [0, 19], sizes = [8, 161], strides = [1, 1]} : vector<8x225xf32> to vector<8x161xf32>
    %23 = vector.extract_strided_slice %12 {offsets = [0, 30], sizes = [8, 161], strides = [1, 1]} : vector<8x225xf32> to vector<8x161xf32>
    %24 = vector.extract_strided_slice %12 {offsets = [0, 31], sizes = [8, 161], strides = [1, 1]} : vector<8x225xf32> to vector<8x161xf32>
    %25 = vector.extract_strided_slice %12 {offsets = [0, 32], sizes = [8, 161], strides = [1, 1]} : vector<8x225xf32> to vector<8x161xf32>
    %26 = vector.extract_strided_slice %12 {offsets = [0, 33], sizes = [8, 161], strides = [1, 1]} : vector<8x225xf32> to vector<8x161xf32>
    %27 = vector.extract_strided_slice %12 {offsets = [0, 34], sizes = [8, 161], strides = [1, 1]} : vector<8x225xf32> to vector<8x161xf32>
    %28 = vector.extract_strided_slice %12 {offsets = [0, 45], sizes = [8, 161], strides = [1, 1]} : vector<8x225xf32> to vector<8x161xf32>
    %29 = vector.extract_strided_slice %12 {offsets = [0, 46], sizes = [8, 161], strides = [1, 1]} : vector<8x225xf32> to vector<8x161xf32>
    %30 = vector.extract_strided_slice %12 {offsets = [0, 47], sizes = [8, 161], strides = [1, 1]} : vector<8x225xf32> to vector<8x161xf32>
    %31 = vector.extract_strided_slice %12 {offsets = [0, 48], sizes = [8, 161], strides = [1, 1]} : vector<8x225xf32> to vector<8x161xf32>
    %32 = vector.extract_strided_slice %12 {offsets = [0, 49], sizes = [8, 161], strides = [1, 1]} : vector<8x225xf32> to vector<8x161xf32>
    %33 = vector.extract_strided_slice %12 {offsets = [0, 60], sizes = [8, 161], strides = [1, 1]} : vector<8x225xf32> to vector<8x161xf32>
    %34 = vector.extract_strided_slice %12 {offsets = [0, 61], sizes = [8, 161], strides = [1, 1]} : vector<8x225xf32> to vector<8x161xf32>
    %35 = vector.extract_strided_slice %12 {offsets = [0, 62], sizes = [8, 161], strides = [1, 1]} : vector<8x225xf32> to vector<8x161xf32>
    %36 = vector.extract_strided_slice %12 {offsets = [0, 63], sizes = [8, 161], strides = [1, 1]} : vector<8x225xf32> to vector<8x161xf32>
    %37 = vector.extract_strided_slice %12 {offsets = [0, 64], sizes = [8, 161], strides = [1, 1]} : vector<8x225xf32> to vector<8x161xf32>
    %38 = tpu.concatenate %13, %14, %15, %16, %17, %18, %19, %20, %21, %22, %23, %24, %25, %26, %27, %28 in 0 : vector<8x161xf32>, vector<8x161xf32>, vector<8x161xf32>, vector<8x161xf32>, vector<8x161xf32>, vector<8x161xf32>, vector<8x161xf32>, vector<8x161xf32>, vector<8x161xf32>, vector<8x161xf32>, vector<8x161xf32>, vector<8x161xf32>, vector<8x161xf32>, vector<8x161xf32>, vector<8x161xf32>, vector<8x161xf32> -> vector<128x161xf32>
    %39 = tpu.concatenate %29, %30, %31, %32, %33, %34, %35, %36, %37 in 0 : vector<8x161xf32>, vector<8x161xf32>, vector<8x161xf32>, vector<8x161xf32>, vector<8x161xf32>, vector<8x161xf32>, vector<8x161xf32>, vector<8x161xf32>, vector<8x161xf32> -> vector<72x161xf32>
    %40 = tpu.concatenate %38, %39 in 0 : vector<128x161xf32>, vector<72x161xf32> -> vector<200x161xf32>
    %c0_7 = arith.constant 0 : index
    %c0_8 = arith.constant 0 : index
    %41 = vector.load %arg3[%c0_7, %c0_8] : memref<8x200xf32, #tpu.memory_space<vmem>>, vector<8x200xf32>
    %cst_9 = arith.constant dense<0.000000e+00> : vector<8x161xf32>
    %42 = tpu.matmul %41, %40, %cst_9 {dimension_numbers = #tpu.dot_dimension_numbers<[1], [0], [0], [1], [0, 0, 1, 1], [], []>} : vector<8x200xf32>, vector<200x161xf32>, vector<8x161xf32> -> vector<8x161xf32>
    %43 = math.tanh %42 : vector<8x161xf32>
    %44 = vector.extract_strided_slice %43 {offsets = [0, 0], sizes = [8, 159], strides = [1, 1]} : vector<8x161xf32> to vector<8x159xf32>
    %45 = vector.extract_strided_slice %43 {offsets = [0, 2], sizes = [8, 159], strides = [1, 1]} : vector<8x161xf32> to vector<8x159xf32>
    %46 = arith.maximumf %44, %45 : vector<8x159xf32>
    %47 = vector.extract_strided_slice %46 {offsets = [0, 0], sizes = [8, 129], strides = [1, 1]} : vector<8x159xf32> to vector<8x129xf32>
    %48 = vector.extract_strided_slice %46 {offsets = [0, 30], sizes = [8, 129], strides = [1, 1]} : vector<8x159xf32> to vector<8x129xf32>
    %49 = arith.maximumf %47, %48 : vector<8x129xf32>
    %c0_10 = arith.constant 0 : index
    %c0_11 = arith.constant 0 : index
    %50 = vector.load %arg5[%c0_10, %c0_11] : memref<129x9xf32, #tpu.memory_space<vmem>>, vector<129x9xf32>
    %cst_12 = arith.constant dense<0.000000e+00> : vector<8x9xf32>
    %51 = tpu.matmul %49, %50, %cst_12 {dimension_numbers = #tpu.dot_dimension_numbers<[1], [0], [0], [1], [0, 0, 1, 1], [], []>} : vector<8x129xf32>, vector<129x9xf32>, vector<8x9xf32> -> vector<8x9xf32>
    %c0_13 = arith.constant 0 : index
    %c0_14 = arith.constant 0 : index
    %c0_15 = arith.constant 0 : index
    %52 = vector.load %arg6[%c0_13, %c0_14, %c0_15] : memref<1x8x9xf32, #tpu.memory_space<vmem>>, vector<1x8x9xf32>
    %53 = vector.shape_cast %52 : vector<1x8x9xf32> to vector<8x9xf32>
    %54 = vector.shape_cast %51 : vector<8x9xf32> to vector<1x8x9xf32>
    tpu.vector_store %arg6[%c0_13, %c0_14, %c0_15], %54 {strides = array<i32>} : memref<1x8x9xf32, #tpu.memory_space<vmem>>, vector<1x8x9xf32>,
    return
  }
  func.func @transform_0(%arg0: i32) -> (i32, i32, i32) {
    %c0_i32 = arith.constant 0 : i32
    %c0_i32_0 = arith.constant 0 : i32
    %c0_i32_1 = arith.constant 0 : i32
    return %arg0, %c0_i32, %c0_i32_0 : i32, i32, i32
  }
  func.func @transform_1(%arg0: i32) -> (i32, i32) {
    %c0_i32 = arith.constant 0 : i32
    %c0_i32_0 = arith.constant 0 : i32
    %c0_i32_1 = arith.constant 0 : i32
    return %c0_i32, %c0_i32_0 : i32, i32
  }
  func.func @transform_2(%arg0: i32) -> (i32, i32) {
    %c0_i32 = arith.constant 0 : i32
    %c0_i32_0 = arith.constant 0 : i32
    %c0_i32_1 = arith.constant 0 : i32
    return %c0_i32, %c0_i32_0 : i32, i32
  }
  func.func @transform_3(%arg0: i32) -> (i32, i32) {
    %c0_i32 = arith.constant 0 : i32
    %c0_i32_0 = arith.constant 0 : i32
    %c0_i32_1 = arith.constant 0 : i32
    return %c0_i32, %c0_i32_0 : i32, i32
  }
  func.func @transform_4(%arg0: i32) -> (i32, i32) {
    %c0_i32 = arith.constant 0 : i32
    %c0_i32_0 = arith.constant 0 : i32
    %c0_i32_1 = arith.constant 0 : i32
    return %c0_i32, %c0_i32_0 : i32, i32
  }
  func.func @transform_5(%arg0: i32) -> (i32, i32, i32) {
    %c0_i32 = arith.constant 0 : i32
    %c0_i32_0 = arith.constant 0 : i32
    %c0_i32_1 = arith.constant 0 : i32
    return %arg0, %c0_i32, %c0_i32_0 : i32, i32, i32
  }
}

</mosaic_0001>

<llo_original>
// kernel: squeeze.35
$region0: #{squeeze.35}
  %s0 = inlined_call_operand.vmem [shape: f32[2,1,30,30], index: 0, kind: input, shape index: {}]
  %s1 = inlined_call_operand.vmem [shape: f32[2,1,900], index: 1, kind: output, shape index: {}]
  $region1: #{squeeze.35} parent=0
    #allocation0 [shape = 'u8[65536]{0}', space=vmem, size = 0x10000, scoped, tag = 'scoped mem for output reshape']
    %v2 = vld [vmem:[%s0] sm:$0x1]
    %s3 = scalar_lea.vmem %s0, 31
    %v4 = vld [vmem:[%s3] sm:$0x2]
    %vm5 = vcmask 1041409
    %v6 = vsel %vm5, %v4, %v2
    %vm7 = vcmask 244736
    %8 = vst.msk [vmem:[#allocation0] sm:$0x1] %vm7, %v6
    %s9 = scalar_lea.vmem [#allocation0], 63
    %10 = vst.msk [vmem:[%s9] sm:$0x2] %vm7, %v6
    %s11 = scalar_lea.vmem %s0, 17
    %v12 = vld [vmem:[%s11] sm:$0x1]
    %s13 = scalar_lea.vmem %s0, 48
    %v14 = vld [vmem:[%s13] sm:$0x2]
    %vm15 = vcmask 1041409
    %v16 = vsel %vm15, %v14, %v12
    %s17 = scalar_lea.vmem %s0, 17
    %v18 = vld [vmem:[%s17] sm:$0x1]
    %s19 = scalar_lea.vmem %s0, 48
    %v20 = vld [vmem:[%s19] sm:$0x2]
    %vm21 = vcmask 1041409
    %v22 = vsel %vm21, %v20, %v18
    %vm23 = vcmask 15360
    %v24 = vsel %vm23, %v22, %v16
    %25 = vrot.lane.b32.xlu0 %v24, 126
    %v26 = vpop.permute.xlu0 %25
    %vm27 = vcmask 228352
    %s28 = scalar_lea.vmem [#allocation0], 32
    %29 = vst.msk [vmem:[%s28] sm:$0x1] %vm27, %v26
    %s30 = scalar_lea.vmem [#allocation0], 95
    %31 = vst.msk [vmem:[%s30] sm:$0x2] %vm27, %v26
    %vm32 = vcmask 1048560
    %s33 = scalar_lea.vmem [#allocation0], 24
    %34 = vst.msk [vmem:[%s33] sm:$0x1] %vm32, %v26
    %s35 = scalar_lea.vmem [#allocation0], 87
    %36 = vst.msk [vmem:[%s35] sm:$0x2] %vm32, %v26
    %s37 = scalar_lea.vmem %s0, 4
    %v38 = vld [vmem:[%s37] sm:$0x1]
    %s39 = scalar_lea.vmem %s0, 35
    %v40 = vld [vmem:[%s39] sm:$0x2]
    %vm41 = vcmask 1041409
    %v42 = vsel %vm41, %v40, %v38
    %s43 = scalar_lea.vmem %s0, 4
    %v44 = vld [vmem:[%s43] sm:$0x1]
    %s45 = scalar_lea.vmem %s0, 35
    %v46 = vld [vmem:[%s45] sm:$0x2]
    %vm47 = vcmask 1041409
    %v48 = vsel %vm47, %v46, %v44
    %vm49 = vcmask 64512
    %v50 = vsel %vm49, %v48, %v42
    %51 = vrot.lane.b32.xlu0 %v50, 120
    %v52 = vpop.permute.xlu0 %51
    %vm53 = vcmask 179200
    %s54 = scalar_lea.vmem [#allocation0], 8
    %55 = vst.msk [vmem:[%s54] sm:$0x1] %vm53, %v52
    %s56 = scalar_lea.vmem [#allocation0], 71
    %57 = vst.msk [vmem:[%s56] sm:$0x2] %vm53, %v52
    %vm58 = vcmask 1048512
    %59 = vst.msk [vmem:[#allocation0] sm:$0x1] %vm58, %v52
    %s60 = scalar_lea.vmem [#allocation0], 63
    %61 = vst.msk [vmem:[%s60] sm:$0x2] %vm58, %v52
    %s62 = scalar_lea.vmem %s0, 21
    %v63 = vld [vmem:[%s62] sm:$0x1]
    %s64 = scalar_lea.vmem %s0, 52
    %v65 = vld [vmem:[%s64] sm:$0x2]
    %vm66 = vcmask 1041409
    %v67 = vsel %vm66, %v65, %v63
    %s68 = scalar_lea.vmem %s0, 21
    %v69 = vld [vmem:[%s68] sm:$0x1]
    %s70 = scalar_lea.vmem %s0, 52
    %v71 = vld [vmem:[%s70] sm:$0x2]
    %vm72 = vcmask 1041409
    %v73 = vsel %vm72, %v71, %v69
    %vm74 = vcmask 80896
    %v75 = vsel %vm74, %v73, %v67
    %76 = vrot.lane.b32.xlu0 %v75, 118
    %v77 = vpop.permute.xlu0 %76
    %vm78 = vcmask 162816
    %s79 = scalar_lea.vmem [#allocation0], 40
    %80 = vst.msk [vmem:[%s79] sm:$0x1] %vm78, %v77
    %s81 = scalar_lea.vmem [#allocation0], 103
    %82 = vst.msk [vmem:[%s81] sm:$0x2] %vm78, %v77
    %vm83 = vcmask 1048496
    %s84 = scalar_lea.vmem [#allocation0], 32
    %85 = vst.msk [vmem:[%s84] sm:$0x1] %vm83, %v77
    %s86 = scalar_lea.vmem [#allocation0], 95
    %87 = vst.msk [vmem:[%s86] sm:$0x2] %vm83, %v77
    %s88 = scalar_lea.vmem %s0, 8
    %v89 = vld [vmem:[%s88] sm:$0x1]
    %s90 = scalar_lea.vmem %s0, 39
    %v91 = vld [vmem:[%s90] sm:$0x2]
    %vm92 = vcmask 1041409
    %v93 = vsel %vm92, %v91, %v89
    %s94 = scalar_lea.vmem %s0, 8
    %v95 = vld [vmem:[%s94] sm:$0x1]
    %s96 = scalar_lea.vmem %s0, 39
    %v97 = vld [vmem:[%s96] sm:$0x2]
    %vm98 = vcmask 1041409
    %v99 = vsel %vm98, %v97, %v95
    %vm100 = vcmask 130048
    %v101 = vsel %vm100, %v99, %v93
    %102 = vrot.lane.b32.xlu0 %v101, 112
    %v103 = vpop.permute.xlu0 %102
    %vm104 = vcmask 113664
    %s105 = scalar_lea.vmem [#allocation0], 16
    %106 = vst.msk [vmem:[%s105] sm:$0x1] %vm104, %v103
    %s107 = scalar_lea.vmem [#allocation0], 79
    %108 = vst.msk [vmem:[%s107] sm:$0x2] %vm104, %v103
    %vm109 = vcmask 1048448
    %s110 = scalar_lea.vmem [#allocation0], 8
    %111 = vst.msk [vmem:[%s110] sm:$0x1] %vm109, %v103
    %s112 = scalar_lea.vmem [#allocation0], 71
    %113 = vst.msk [vmem:[%s112] sm:$0x2] %vm109, %v103
    %s114 = scalar_lea.vmem %s0, 25
    %v115 = vld [vmem:[%s114] sm:$0x1]
    %s116 = scalar_lea.vmem %s0, 56
    %v117 = vld [vmem:[%s116] sm:$0x2]
    %vm118 = vcmask 1041409
    %v119 = vsel %vm118, %v117, %v115
    %s120 = scalar_lea.vmem %s0, 25
    %v121 = vld [vmem:[%s120] sm:$0x1]
    %s122 = scalar_lea.vmem %s0, 56
    %v123 = vld [vmem:[%s122] sm:$0x2]
    %vm124 = vcmask 1041409
    %v125 = vsel %vm124, %v123, %v121
    %vm126 = vcmask 146432
    %v127 = vsel %vm126, %v125, %v119
    %128 = vrot.lane.b32.xlu0 %v127, 110
    %v129 = vpop.permute.xlu0 %128
    %vm130 = vcmask 97280
    %s131 = scalar_lea.vmem [#allocation0], 48
    %132 = vst.msk [vmem:[%s131] sm:$0x1] %vm130, %v129
    %s133 = scalar_lea.vmem [#allocation0], 111
    %134 = vst.msk [vmem:[%s133] sm:$0x2] %vm130, %v129
    %vm135 = vcmask 1048432
    %s136 = scalar_lea.vmem [#allocation0], 40
    %137 = vst.msk [vmem:[%s136] sm:$0x1] %vm135, %v129
    %s138 = scalar_lea.vmem [#allocation0], 103
    %139 = vst.msk [vmem:[%s138] sm:$0x2] %vm135, %v129
    %s140 = scalar_lea.vmem %s0, 12
    %v141 = vld [vmem:[%s140] sm:$0x1]
    %s142 = scalar_lea.vmem %s0, 43
    %v143 = vld [vmem:[%s142] sm:$0x2]
    %vm144 = vcmask 1041409
    %v145 = vsel %vm144, %v143, %v141
    %s146 = scalar_lea.vmem %s0, 12
    %v147 = vld [vmem:[%s146] sm:$0x1]
    %s148 = scalar_lea.vmem %s0, 43
    %v149 = vld [vmem:[%s148] sm:$0x2]
    %vm150 = vcmask 1041409
    %v151 = vsel %vm150, %v149, %v147
    %vm152 = vcmask 195584
    %v153 = vsel %vm152, %v151, %v145
    %154 = vrot.lane.b32.xlu0 %v153, 104
    %v155 = vpop.permute.xlu0 %154
    %vm156 = vcmask 48128
    %s157 = scalar_lea.vmem [#allocation0], 24
    %158 = vst.msk [vmem:[%s157] sm:$0x1] %vm156, %v155
    %s159 = scalar_lea.vmem [#allocation0], 87
    %160 = vst.msk [vmem:[%s159] sm:$0x2] %vm156, %v155
    %vm161 = vcmask 1048384
    %s162 = scalar_lea.vmem [#allocation0], 16
    %163 = vst.msk [vmem:[%s162] sm:$0x1] %vm161, %v155
    %s164 = scalar_lea.vmem [#allocation0], 79
    %165 = vst.msk [vmem:[%s164] sm:$0x2] %vm161, %v155
    %s166 = scalar_lea.vmem %s0, 29
    %v167 = vld [vmem:[%s166] sm:$0x1]
    %s168 = scalar_lea.vmem %s0, 60
    %v169 = vld [vmem:[%s168] sm:$0x2]
    %vm170 = vcmask 1041409
    %v171 = vsel %vm170, %v169, %v167
    %s172 = scalar_lea.vmem %s0, 29
    %v173 = vld [vmem:[%s172] sm:$0x1]
    %s174 = scalar_lea.vmem %s0, 60
    %v175 = vld [vmem:[%s174] sm:$0x2]
    %vm176 = vcmask 1041409
    %v177 = vsel %vm176, %v175, %v173
    %vm178 = vcmask 211968
    %v179 = vsel %vm178, %v177, %v171
    %180 = vrot.lane.b32.xlu0 %v179, 102
    %v181 = vpop.permute.xlu0 %180
    %vm182 = vcmask 31744
    %s183 = scalar_lea.vmem [#allocation0], 56
    %184 = vst.msk [vmem:[%s183] sm:$0x1] %vm182, %v181
    %s185 = scalar_lea.vmem [#allocation0], 119
    %186 = vst.msk [vmem:[%s185] sm:$0x2] %vm182, %v181
    %vm187 = vcmask 1048368
    %s188 = scalar_lea.vmem [#allocation0], 48
    %189 = vst.msk [vmem:[%s188] sm:$0x1] %vm187, %v181
    %s190 = scalar_lea.vmem [#allocation0], 111
    %191 = vst.msk [vmem:[%s190] sm:$0x2] %vm187, %v181
    %s192 = scalar_lea.vmem %s0, 16
    %v193 = vld [vmem:[%s192] sm:$0x1]
    %s194 = scalar_lea.vmem %s0, 47
    %v195 = vld [vmem:[%s194] sm:$0x2]
    %vm196 = vcmask 1041409
    %v197 = vsel %vm196, %v195, %v193
    %198 = vrot.lane.b32.xlu0 %v197, 96
    %v199 = vpop.permute.xlu0 %198
    %vm200 = vcmask 1031936
    %s201 = scalar_lea.vmem [#allocation0], 24
    %202 = vst.msk [vmem:[%s201] sm:$0x1] %vm200, %v199
    %s203 = scalar_lea.vmem [#allocation0], 87
    %204 = vst.msk [vmem:[%s203] sm:$0x2] %vm200, %v199
    %s205 = scalar_lea.vmem %s0, 3
    %v206 = vld [vmem:[%s205] sm:$0x1]
    %s207 = scalar_lea.vmem %s0, 34
    %v208 = vld [vmem:[%s207] sm:$0x2]
    %vm209 = vcmask 1041409
    %v210 = vsel %vm209, %v208, %v206
    %211 = vrot.lane.b32.xlu0 %v210, 90
    %v212 = vpop.permute.xlu0 %211
    %vm213 = vcmask 982736
    %214 = vst.msk [vmem:[#allocation0] sm:$0x1] %vm213, %v212
    %s215 = scalar_lea.vmem [#allocation0], 63
    %216 = vst.msk [vmem:[%s215] sm:$0x2] %vm213, %v212
    %s217 = scalar_lea.vmem %s0, 20
    %v218 = vld [vmem:[%s217] sm:$0x1]
    %s219 = scalar_lea.vmem %s0, 51
    %v220 = vld [vmem:[%s219] sm:$0x2]
    %vm221 = vcmask 1041409
    %v222 = vsel %vm221, %v220, %v218
    %223 = vrot.lane.b32.xlu0 %v222, 88
    %v224 = vpop.permute.xlu0 %223
    %vm225 = vcmask 966336
    %s226 = scalar_lea.vmem [#allocation0], 32
    %227 = vst.msk [vmem:[%s226] sm:$0x1] %vm225, %v224
    %s228 = scalar_lea.vmem [#allocation0], 95
    %229 = vst.msk [vmem:[%s228] sm:$0x2] %vm225, %v224
    %s230 = scalar_lea.vmem %s0, 7
    %v231 = vld [vmem:[%s230] sm:$0x1]
    %s232 = scalar_lea.vmem %s0, 38
    %v233 = vld [vmem:[%s232] sm:$0x2]
    %vm234 = vcmask 1041409
    %v235 = vsel %vm234, %v233, %v231
    %236 = vrot.lane.b32.xlu0 %v235, 82
    %v237 = vpop.permute.xlu0 %236
    %vm238 = vcmask 917136
    %s239 = scalar_lea.vmem [#allocation0], 8
    %240 = vst.msk [vmem:[%s239] sm:$0x1] %vm238, %v237
    %s241 = scalar_lea.vmem [#allocation0], 71
    %242 = vst.msk [vmem:[%s241] sm:$0x2] %vm238, %v237
    %s243 = scalar_lea.vmem %s0, 24
    %v244 = vld [vmem:[%s243] sm:$0x1]
    %s245 = scalar_lea.vmem %s0, 55
    %v246 = vld [vmem:[%s245] sm:$0x2]
    %vm247 = vcmask 1041409
    %v248 = vsel %vm247, %v246, %v244
    %249 = vrot.lane.b32.xlu0 %v248, 80
    %v250 = vpop.permute.xlu0 %249
    %vm251 = vcmask 900736
    %s252 = scalar_lea.vmem [#allocation0], 40
    %253 = vst.msk [vmem:[%s252] sm:$0x1] %vm251, %v250
    %s254 = scalar_lea.vmem [#allocation0], 103
    %255 = vst.msk [vmem:[%s254] sm:$0x2] %vm251, %v250
    %s256 = scalar_lea.vmem %s0, 11
    %v257 = vld [vmem:[%s256] sm:$0x1]
    %s258 = scalar_lea.vmem %s0, 42
    %v259 = vld [vmem:[%s258] sm:$0x2]
    %vm260 = vcmask 1041409
    %v261 = vsel %vm260, %v259, %v257
    %262 = vrot.lane.b32.xlu0 %v261, 74
    %v263 = vpop.permute.xlu0 %262
    %vm264 = vcmask 851536
    %s265 = scalar_lea.vmem [#allocation0], 16
    %266 = vst.msk [vmem:[%s265] sm:$0x1] %vm264, %v263
    %s267 = scalar_lea.vmem [#allocation0], 79
    %268 = vst.msk [vmem:[%s267] sm:$0x2] %vm264, %v263
    %s269 = scalar_lea.vmem %s0, 28
    %v270 = vld [vmem:[%s269] sm:$0x1]
    %s271 = scalar_lea.vmem %s0, 59
    %v272 = vld [vmem:[%s271] sm:$0x2]
    %vm273 = vcmask 1041409
    %v274 = vsel %vm273, %v272, %v270
    %275 = vrot.lane.b32.xlu0 %v274, 72
    %v276 = vpop.permute.xlu0 %275
    %vm277 = vcmask 835136
    %s278 = scalar_lea.vmem [#allocation0], 48
    %279 = vst.msk [vmem:[%s278] sm:$0x1] %vm277, %v276
    %s280 = scalar_lea.vmem [#allocation0], 111
    %281 = vst.msk [vmem:[%s280] sm:$0x2] %vm277, %v276
    %s282 = scalar_lea.vmem %s0, 15
    %v283 = vld [vmem:[%s282] sm:$0x1]
    %s284 = scalar_lea.vmem %s0, 46
    %v285 = vld [vmem:[%s284] sm:$0x2]
    %vm286 = vcmask 1041409
    %v287 = vsel %vm286, %v285, %v283
    %288 = vrot.lane.b32.xlu0 %v287, 66
    %v289 = vpop.permute.xlu0 %288
    %vm290 = vcmask 785936
    %s291 = scalar_lea.vmem [#allocation0], 24
    %292 = vst.msk [vmem:[%s291] sm:$0x1] %vm290, %v289
    %s293 = scalar_lea.vmem [#allocation0], 87
    %294 = vst.msk [vmem:[%s293] sm:$0x2] %vm290, %v289
    %s295 = scalar_lea.vmem %s0, 2
    %v296 = vld [vmem:[%s295] sm:$0x1]
    %s297 = scalar_lea.vmem %s0, 33
    %v298 = vld [vmem:[%s297] sm:$0x2]
    %vm299 = vcmask 1041409
    %v300 = vsel %vm299, %v298, %v296
    %301 = vrot.lane.b32.xlu0 %v300, 60
    %v302 = vpop.permute.xlu0 %301
    %vm303 = vcmask 736736
    %304 = vst.msk [vmem:[#allocation0] sm:$0x1] %vm303, %v302
    %s305 = scalar_lea.vmem [#allocation0], 63
    %306 = vst.msk [vmem:[%s305] sm:$0x2] %vm303, %v302
    %s307 = scalar_lea.vmem %s0, 19
    %v308 = vld [vmem:[%s307] sm:$0x1]
    %s309 = scalar_lea.vmem %s0, 50
    %v310 = vld [vmem:[%s309] sm:$0x2]
    %vm311 = vcmask 1041409
    %v312 = vsel %vm311, %v310, %v308
    %313 = vrot.lane.b32.xlu0 %v312, 58
    %v314 = vpop.permute.xlu0 %313
    %vm315 = vcmask 720336
    %s316 = scalar_lea.vmem [#allocation0], 32
    %317 = vst.msk [vmem:[%s316] sm:$0x1] %vm315, %v314
    %s318 = scalar_lea.vmem [#allocation0], 95
    %319 = vst.msk [vmem:[%s318] sm:$0x2] %vm315, %v314
    %s320 = scalar_lea.vmem %s0, 6
    %v321 = vld [vmem:[%s320] sm:$0x1]
    %s322 = scalar_lea.vmem %s0, 37
    %v323 = vld [vmem:[%s322] sm:$0x2]
    %vm324 = vcmask 1041409
    %v325 = vsel %vm324, %v323, %v321
    %326 = vrot.lane.b32.xlu0 %v325, 52
    %v327 = vpop.permute.xlu0 %326
    %vm328 = vcmask 671136
    %s329 = scalar_lea.vmem [#allocation0], 8
    %330 = vst.msk [vmem:[%s329] sm:$0x1] %vm328, %v327
    %s331 = scalar_lea.vmem [#allocation0], 71
    %332 = vst.msk [vmem:[%s331] sm:$0x2] %vm328, %v327
    %s333 = scalar_lea.vmem %s0, 23
    %v334 = vld [vmem:[%s333] sm:$0x1]
    %s335 = scalar_lea.vmem %s0, 54
    %v336 = vld [vmem:[%s335] sm:$0x2]
    %vm337 = vcmask 1041409
    %v338 = vsel %vm337, %v336, %v334
    %339 = vrot.lane.b32.xlu0 %v338, 50
    %v340 = vpop.permute.xlu0 %339
    %vm341 = vcmask 654736
    %s342 = scalar_lea.vmem [#allocation0], 40
    %343 = vst.msk [vmem:[%s342] sm:$0x1] %vm341, %v340
    %s344 = scalar_lea.vmem [#allocation0], 103
    %345 = vst.msk [vmem:[%s344] sm:$0x2] %vm341, %v340
    %s346 = scalar_lea.vmem %s0, 10
    %v347 = vld [vmem:[%s346] sm:$0x1]
    %s348 = scalar_lea.vmem %s0, 41
    %v349 = vld [vmem:[%s348] sm:$0x2]
    %vm350 = vcmask 1041409
    %v351 = vsel %vm350, %v349, %v347
    %352 = vrot.lane.b32.xlu0 %v351, 44
    %v353 = vpop.permute.xlu0 %352
    %vm354 = vcmask 605536
    %s355 = scalar_lea.vmem [#allocation0], 16
    %356 = vst.msk [vmem:[%s355] sm:$0x1] %vm354, %v353
    %s357 = scalar_lea.vmem [#allocation0], 79
    %358 = vst.msk [vmem:[%s357] sm:$0x2] %vm354, %v353
    %s359 = scalar_lea.vmem %s0, 27
    %v360 = vld [vmem:[%s359] sm:$0x1]
    %s361 = scalar_lea.vmem %s0, 58
    %v362 = vld [vmem:[%s361] sm:$0x2]
    %vm363 = vcmask 1041409
    %v364 = vsel %vm363, %v362, %v360
    %365 = vrot.lane.b32.xlu0 %v364, 42
    %v366 = vpop.permute.xlu0 %365
    %vm367 = vcmask 589136
    %s368 = scalar_lea.vmem [#allocation0], 48
    %369 = vst.msk [vmem:[%s368] sm:$0x1] %vm367, %v366
    %s370 = scalar_lea.vmem [#allocation0], 111
    %371 = vst.msk [vmem:[%s370] sm:$0x2] %vm367, %v366
    %s372 = scalar_lea.vmem %s0, 14
    %v373 = vld [vmem:[%s372] sm:$0x1]
    %s374 = scalar_lea.vmem %s0, 45
    %v375 = vld [vmem:[%s374] sm:$0x2]
    %vm376 = vcmask 1041409
    %v377 = vsel %vm376, %v375, %v373
    %378 = vrot.lane.b32.xlu0 %v377, 36
    %v379 = vpop.permute.xlu0 %378
    %vm380 = vcmask 539936
    %s381 = scalar_lea.vmem [#allocation0], 24
    %382 = vst.msk [vmem:[%s381] sm:$0x1] %vm380, %v379
    %s383 = scalar_lea.vmem [#allocation0], 87
    %384 = vst.msk [vmem:[%s383] sm:$0x2] %vm380, %v379
    %s385 = scalar_lea.vmem %s0, 1
    %v386 = vld [vmem:[%s385] sm:$0x1]
    %s387 = scalar_lea.vmem %s0, 32
    %v388 = vld [vmem:[%s387] sm:$0x2]
    %vm389 = vcmask 1041409
    %v390 = vsel %vm389, %v388, %v386
    %391 = vrot.lane.b32.xlu0 %v390, 30
    %v392 = vpop.permute.xlu0 %391
    %vm393 = vcmask 490736
    %394 = vst.msk [vmem:[#allocation0] sm:$0x1] %vm393, %v392
    %s395 = scalar_lea.vmem [#allocation0], 63
    %396 = vst.msk [vmem:[%s395] sm:$0x2] %vm393, %v392
    %s397 = scalar_lea.vmem %s0, 18
    %v398 = vld [vmem:[%s397] sm:$0x1]
    %s399 = scalar_lea.vmem %s0, 49
    %v400 = vld [vmem:[%s399] sm:$0x2]
    %vm401 = vcmask 1041409
    %v402 = vsel %vm401, %v400, %v398
    %403 = vrot.lane.b32.xlu0 %v402, 28
    %v404 = vpop.permute.xlu0 %403
    %vm405 = vcmask 474336
    %s406 = scalar_lea.vmem [#allocation0], 32
    %407 = vst.msk [vmem:[%s406] sm:$0x1] %vm405, %v404
    %s408 = scalar_lea.vmem [#allocation0], 95
    %409 = vst.msk [vmem:[%s408] sm:$0x2] %vm405, %v404
    %s410 = scalar_lea.vmem %s0, 5
    %v411 = vld [vmem:[%s410] sm:$0x1]
    %s412 = scalar_lea.vmem %s0, 36
    %v413 = vld [vmem:[%s412] sm:$0x2]
    %vm414 = vcmask 1041409
    %v415 = vsel %vm414, %v413, %v411
    %416 = vrot.lane.b32.xlu0 %v415, 22
    %v417 = vpop.permute.xlu0 %416
    %vm418 = vcmask 425136
    %s419 = scalar_lea.vmem [#allocation0], 8
    %420 = vst.msk [vmem:[%s419] sm:$0x1] %vm418, %v417
    %s421 = scalar_lea.vmem [#allocation0], 71
    %422 = vst.msk [vmem:[%s421] sm:$0x2] %vm418, %v417
    %s423 = scalar_lea.vmem %s0, 22
    %v424 = vld [vmem:[%s423] sm:$0x1]
    %s425 = scalar_lea.vmem %s0, 53
    %v426 = vld [vmem:[%s425] sm:$0x2]
    %vm427 = vcmask 1041409
    %v428 = vsel %vm427, %v426, %v424
    %429 = vrot.lane.b32.xlu0 %v428, 20
    %v430 = vpop.permute.xlu0 %429
    %vm431 = vcmask 408736
    %s432 = scalar_lea.vmem [#allocation0], 40
    %433 = vst.msk [vmem:[%s432] sm:$0x1] %vm431, %v430
    %s434 = scalar_lea.vmem [#allocation0], 103
    %435 = vst.msk [vmem:[%s434] sm:$0x2] %vm431, %v430
    %s436 = scalar_lea.vmem %s0, 9
    %v437 = vld [vmem:[%s436] sm:$0x1]
    %s438 = scalar_lea.vmem %s0, 40
    %v439 = vld [vmem:[%s438] sm:$0x2]
    %vm440 = vcmask 1041409
    %v441 = vsel %vm440, %v439, %v437
    %442 = vrot.lane.b32.xlu0 %v441, 14
    %v443 = vpop.permute.xlu0 %442
    %vm444 = vcmask 359536
    %s445 = scalar_lea.vmem [#allocation0], 16
    %446 = vst.msk [vmem:[%s445] sm:$0x1] %vm444, %v443
    %s447 = scalar_lea.vmem [#allocation0], 79
    %448 = vst.msk [vmem:[%s447] sm:$0x2] %vm444, %v443
    %s449 = scalar_lea.vmem %s0, 26
    %v450 = vld [vmem:[%s449] sm:$0x1]
    %s451 = scalar_lea.vmem %s0, 57
    %v452 = vld [vmem:[%s451] sm:$0x2]
    %vm453 = vcmask 1041409
    %v454 = vsel %vm453, %v452, %v450
    %455 = vrot.lane.b32.xlu0 %v454, 12
    %v456 = vpop.permute.xlu0 %455
    %vm457 = vcmask 343136
    %s458 = scalar_lea.vmem [#allocation0], 48
    %459 = vst.msk [vmem:[%s458] sm:$0x1] %vm457, %v456
    %s460 = scalar_lea.vmem [#allocation0], 111
    %461 = vst.msk [vmem:[%s460] sm:$0x2] %vm457, %v456
    %s462 = scalar_lea.vmem %s0, 13
    %v463 = vld [vmem:[%s462] sm:$0x1]
    %s464 = scalar_lea.vmem %s0, 44
    %v465 = vld [vmem:[%s464] sm:$0x2]
    %vm466 = vcmask 1041409
    %v467 = vsel %vm466, %v465, %v463
    %468 = vrot.lane.b32.xlu0 %v467, 6
    %v469 = vpop.permute.xlu0 %468
    %vm470 = vcmask 293936
    %s471 = scalar_lea.vmem [#allocation0], 24
    %472 = vst.msk [vmem:[%s471] sm:$0x1] %vm470, %v469
    %s473 = scalar_lea.vmem [#allocation0], 87
    %474 = vst.msk [vmem:[%s473] sm:$0x2] %vm470, %v469
    %s476 = ssub.s32 2, 1
    %v477 = vld [vmem:[#allocation0] sm:%s476]
    %s479 = ssub.s32 2, 1
    %480 = vst [vmem:[%s1] sm:%s479] %v477
    %s481 = scalar_lea.vmem [#allocation0], 8
    %v482 = vld [vmem:[%s481] sm:%s476]
    %s484 = ssub.s32 2, 1
    %s485 = scalar_lea.vmem %s1, 1
    %486 = vst [vmem:[%s485] sm:%s484] %v482
    %s487 = scalar_lea.vmem [#allocation0], 16
    %v488 = vld [vmem:[%s487] sm:%s476]
    %s490 = ssub.s32 2, 1
    %s491 = scalar_lea.vmem %s1, 2
    %492 = vst [vmem:[%s491] sm:%s490] %v488
    %s493 = scalar_lea.vmem [#allocation0], 24
    %v494 = vld [vmem:[%s493] sm:%s476]
    %s496 = ssub.s32 2, 1
    %s497 = scalar_lea.vmem %s1, 3
    %498 = vst [vmem:[%s497] sm:%s496] %v494
    %s499 = scalar_lea.vmem [#allocation0], 32
    %v500 = vld [vmem:[%s499] sm:%s476]
    %s502 = ssub.s32 2, 1
    %s503 = scalar_lea.vmem %s1, 4
    %504 = vst [vmem:[%s503] sm:%s502] %v500
    %s505 = scalar_lea.vmem [#allocation0], 40
    %v506 = vld [vmem:[%s505] sm:%s476]
    %s508 = ssub.s32 2, 1
    %s509 = scalar_lea.vmem %s1, 5
    %510 = vst [vmem:[%s509] sm:%s508] %v506
    %s511 = scalar_lea.vmem [#allocation0], 48
    %v512 = vld [vmem:[%s511] sm:%s476]
    %s514 = ssub.s32 2, 1
    %s515 = scalar_lea.vmem %s1, 6
    %516 = vst [vmem:[%s515] sm:%s514] %v512
    %s517 = scalar_lea.vmem [#allocation0], 56
    %v518 = vld [vmem:[%s517] sm:%s476]
    %s520 = ssub.s32 2, 1
    %s521 = scalar_lea.vmem %s1, 7
    %522 = vst [vmem:[%s521] sm:%s520] %v518
    %s523 = scalar_lea.vmem [#allocation0], 64
    %v524 = vld [vmem:[%s523] sm:%s476]
    %s526 = ssub.s32 2, 1
    %s527 = scalar_lea.vmem %s1, 8
    %528 = vst [vmem:[%s527] sm:%s526] %v524
    %s529 = scalar_lea.vmem [#allocation0], 72
    %v530 = vld [vmem:[%s529] sm:%s476]
    %s532 = ssub.s32 2, 1
    %s533 = scalar_lea.vmem %s1, 9
    %534 = vst [vmem:[%s533] sm:%s532] %v530
    %s535 = scalar_lea.vmem [#allocation0], 80
    %v536 = vld [vmem:[%s535] sm:%s476]
    %s538 = ssub.s32 2, 1
    %s539 = scalar_lea.vmem %s1, 10
    %540 = vst [vmem:[%s539] sm:%s538] %v536
    %s541 = scalar_lea.vmem [#allocation0], 88
    %v542 = vld [vmem:[%s541] sm:%s476]
    %s544 = ssub.s32 2, 1
    %s545 = scalar_lea.vmem %s1, 11
    %546 = vst [vmem:[%s545] sm:%s544] %v542
    %s547 = scalar_lea.vmem [#allocation0], 96
    %v548 = vld [vmem:[%s547] sm:%s476]
    %s550 = ssub.s32 2, 1
    %s551 = scalar_lea.vmem %s1, 12
    %552 = vst [vmem:[%s551] sm:%s550] %v548
    %s553 = scalar_lea.vmem [#allocation0], 104
    %v554 = vld [vmem:[%s553] sm:%s476]
    %s556 = ssub.s32 2, 1
    %s557 = scalar_lea.vmem %s1, 13
    %558 = vst [vmem:[%s557] sm:%s556] %v554
    %s559 = scalar_lea.vmem [#allocation0], 112
    %v560 = vld [vmem:[%s559] sm:%s476]
    %s562 = ssub.s32 2, 1
    %s563 = scalar_lea.vmem %s1, 14
    %564 = vst [vmem:[%s563] sm:%s562] %v560
    %s565 = scalar_lea.vmem [#allocation0], 120
    %v566 = vld [vmem:[%s565] sm:%s476]
    %s568 = ssub.s32 2, 1
    %s569 = scalar_lea.vmem %s1, 15
    %570 = vst [vmem:[%s569] sm:%s568] %v566

// kernel: cnn_forward.1
$region0: #{cnn_forward.1}
  #allocation0 [shape = 'u32[]', space=smem, size = 0x4, offset = 0x4, fixed_abs, tag = 'smem constant byte address 0x4 - core index']
  #allocation1 [shape = 'u32[72,128]{1,0:T(1,128)}', space=vmem, size = 0x9000, scoped, tag = 'internal scratch']
  %s0 = inlined_call_operand.vmem [shape: f32[2,27,900], index: 0, kind: input, shape index: {}]
  %s1 = inlined_call_operand.vmem [shape: f32[8,27], index: 1, kind: input, shape index: {}]
  %s2 = inlined_call_operand.vmem [shape: f32[8,200], index: 2, kind: input, shape index: {}]
  %s3 = inlined_call_operand.vmem [shape: f32[869,225], index: 3, kind: input, shape index: {}]
  %s4 = inlined_call_operand.vmem [shape: f32[129,9], index: 4, kind: input, shape index: {}]
  %s5 = inlined_call_operand.vmem [shape: f32[2,8,9], index: 5, kind: output, shape index: {}]
  %s6 = sld [smem:[#allocation0]]
  $region53: #{cnn_forward.1} parent=0
    _
  %s8 = ssub.s32 1, %s6
  %s9 = scalar_select 0, %s8, %s6
  loop: start=0, step=1, limit=4
  $region2: #{cnn_forward.1} parent=0 // loop_pre_header
    _
  $region3: #{cnn_forward.1} parent=0 // loop_header
    %s11 = sphi 0, %s15
    %p12 = scmp.ge.s32.totalorder %s11, 4
    %s21 = sphi 0, %s23
    %s24 = sphi 0, %s21
    %s25 = sphi 0, %s24
    %s41 = sphi 0, %s25
    %s45 = sphi 0, %s45
    %s47 = sphi 0, %s45
    %s48 = sphi 0, %s47
    %s62 = sphi 0, %s48
    %s66 = sphi 0, %s66
    %s68 = sphi 0, %s66
    %s69 = sphi 0, %s68
    %s83 = sphi 0, %s69
    %s87 = sphi 0, %s87
    %s89 = sphi 0, %s87
    %s90 = sphi 0, %s89
    %s104 = sphi 0, %s90
    %s108 = sphi 0, %s108
    %s110 = sphi 0, %s108
    %s111 = sphi 0, %s110
    %s125 = sphi 0, %s111
    %s131 = sphi 0, %s133
    %s134 = sphi 0, %s131
    %s135 = sphi 0, %s134
    %s151 = sphi 0, %s135
  $region4: #{cnn_forward.1} parent=0 // loop_header_branch
    %14 = sbr.rel (%p12) target = $region8
  $region5: #{cnn_forward.1} parent=0 // loop_body
    %s16 = ssub.s32 %s11, 1
    %s17 = ssub.s32 %s11, 2
    %s18 = sadd.s32 %s11, 1
    %s19 = ssub.s32 %s11, %s18
    %p20 = scmp.eq.s32.totalorder %s19, 0
    %s22 = sadd.s32 %s21, 1
    %s23 = scalar_select %p20, %s21, %s22
    %p26 = pneg %p20
    %p27 = scmp.eq.s32.totalorder %s11, 1
    %p28 = por %p26, %p27
    %p29 = scmp.ne.s32.totalorder %s21, %s24
    %p30 = scmp.eq.s32.totalorder %s11, 0
    %p31 = por %p29, %p30
    %p32 = scmp.ne.s32.totalorder %s21, %s24
    %p33 = scmp.eq.s32.totalorder %s16, 1
    %p34 = por %p32, %p33
    %p35 = scmp.ne.s32.totalorder %s24, %s25
    %p36 = scmp.eq.s32.totalorder %s16, 0
    %p37 = por %p35, %p36
    %p38 = scmp.ne.s32.totalorder %s24, %s25
    %p39 = scmp.eq.s32.totalorder %s17, 1
    %p40 = por %p38, %p39
    %p42 = scmp.ne.s32.totalorder %s25, %s41
    %p43 = scmp.eq.s32.totalorder %s17, 0
    %p44 = por %p42, %p43
    %s46 = sadd.s32 %s45, 1
    %p49 = scmp.eq.s32.totalorder %s11, 1
    %p50 = scmp.ne.s32.totalorder %s45, %s47
    %p51 = scmp.eq.s32.totalorder %s11, 0
    %p52 = por %p50, %p51
    %p53 = scmp.ne.s32.totalorder %s45, %s47
    %p54 = scmp.eq.s32.totalorder %s16, 1
    %p55 = por %p53, %p54
    %p56 = scmp.ne.s32.totalorder %s47, %s48
    %p57 = scmp.eq.s32.totalorder %s16, 0
    %p58 = por %p56, %p57
    %p59 = scmp.ne.s32.totalorder %s47, %s48
    %p60 = scmp.eq.s32.totalorder %s17, 1
    %p61 = por %p59, %p60
    %p63 = scmp.ne.s32.totalorder %s48, %s62
    %p64 = scmp.eq.s32.totalorder %s17, 0
    %p65 = por %p63, %p64
    %s67 = sadd.s32 %s66, 1
    %p70 = scmp.eq.s32.totalorder %s11, 1
    %p71 = scmp.ne.s32.totalorder %s66, %s68
    %p72 = scmp.eq.s32.totalorder %s11, 0
    %p73 = por %p71, %p72
    %p74 = scmp.ne.s32.totalorder %s66, %s68
    %p75 = scmp.eq.s32.totalorder %s16, 1
    %p76 = por %p74, %p75
    %p77 = scmp.ne.s32.totalorder %s68, %s69
    %p78 = scmp.eq.s32.totalorder %s16, 0
    %p79 = por %p77, %p78
    %p80 = scmp.ne.s32.totalorder %s68, %s69
    %p81 = scmp.eq.s32.totalorder %s17, 1
    %p82 = por %p80, %p81
    %p84 = scmp.ne.s32.totalorder %s69, %s83
    %p85 = scmp.eq.s32.totalorder %s17, 0
    %p86 = por %p84, %p85
    %s88 = sadd.s32 %s87, 1
    %p91 = scmp.eq.s32.totalorder %s11, 1
    %p92 = scmp.ne.s32.totalorder %s87, %s89
    %p93 = scmp.eq.s32.totalorder %s11, 0
    %p94 = por %p92, %p93
    %p95 = scmp.ne.s32.totalorder %s87, %s89
    %p96 = scmp.eq.s32.totalorder %s16, 1
    %p97 = por %p95, %p96
    %p98 = scmp.ne.s32.totalorder %s89, %s90
    %p99 = scmp.eq.s32.totalorder %s16, 0
    %p100 = por %p98, %p99
    %p101 = scmp.ne.s32.totalorder %s89, %s90
    %p102 = scmp.eq.s32.totalorder %s17, 1
    %p103 = por %p101, %p102
    %p105 = scmp.ne.s32.totalorder %s90, %s104
    %p106 = scmp.eq.s32.totalorder %s17, 0
    %p107 = por %p105, %p106
    %s109 = sadd.s32 %s108, 1
    %p112 = scmp.eq.s32.totalorder %s11, 1
    %p113 = scmp.ne.s32.totalorder %s108, %s110
    %p114 = scmp.eq.s32.totalorder %s11, 0
    %p115 = por %p113, %p114
    %p116 = scmp.ne.s32.totalorder %s108, %s110
    %p117 = scmp.eq.s32.totalorder %s16, 1
    %p118 = por %p116, %p117
    %p119 = scmp.ne.s32.totalorder %s110, %s111
    %p120 = scmp.eq.s32.totalorder %s16, 0
    %p121 = por %p119, %p120
    %p122 = scmp.ne.s32.totalorder %s110, %s111
    %p123 = scmp.eq.s32.totalorder %s17, 1
    %p124 = por %p122, %p123
    %p126 = scmp.ne.s32.totalorder %s111, %s125
    %p127 = scmp.eq.s32.totalorder %s17, 0
    %p128 = por %p126, %p127
    %s129 = ssub.s32 %s11, %s18
    %p130 = scmp.eq.s32.totalorder %s129, 0
    %s132 = sadd.s32 %s131, 1
    %s133 = scalar_select %p130, %s131, %s132
    %p136 = pneg %p130
    %p137 = scmp.eq.s32.totalorder %s11, 1
    %p138 = por %p136, %p137
    %p139 = scmp.ne.s32.totalorder %s131, %s134
    %p140 = scmp.eq.s32.totalorder %s11, 0
    %p141 = por %p139, %p140
    %p142 = scmp.ne.s32.totalorder %s131, %s134
    %p143 = scmp.eq.s32.totalorder %s16, 1
    %p144 = por %p142, %p143
    %p145 = scmp.ne.s32.totalorder %s134, %s135
    %p146 = scmp.eq.s32.totalorder %s16, 0
    %p147 = por %p145, %p146
    %p148 = scmp.ne.s32.totalorder %s134, %s135
    %p149 = scmp.eq.s32.totalorder %s17, 1
    %p150 = por %p148, %p149
    %p152 = scmp.ne.s32.totalorder %s135, %s151
    %p153 = scmp.eq.s32.totalorder %s17, 0
    %p154 = por %p152, %p153
    %p155 = scmp.le.s32.totalorder 1, %s11
    %p156 = scmp.lt.s32.totalorder %s11, 3
    %p157 = pnand %p155, %p156
    %p158 = pneg %p157
    // Predicated region
    $region9: #{cnn_forward.1} parent=5 // pred_check
      _
    $region10: #{cnn_forward.1} parent=5 // pred_check_branch
      %160 = sbr.rel (%p157) target = $region12
    $region11: #{cnn_forward.1} parent=5 // pred_region
      %s161 = ssub.s32 %s11, 1
      // Predicated region
      $region13: #{cnn_forward.1} parent=11 // pred_check
        %p162 = pneg %p58
      $region14: #{cnn_forward.1} parent=11 // pred_check_branch
        %164 = sbr.rel (%p162) target = $region16
      $region15: #{cnn_forward.1} parent=11 // pred_region
        _
      $region16: #{cnn_forward.1} parent=11 // pred_fallthru
        _
      // Predicated region
      $region17: #{cnn_forward.1} parent=11 // pred_check
        %p165 = pneg %p79
      $region18: #{cnn_forward.1} parent=11 // pred_check_branch
        %167 = sbr.rel (%p165) target = $region20
      $region19: #{cnn_forward.1} parent=11 // pred_region
        _
      $region20: #{cnn_forward.1} parent=11 // pred_fallthru
        _
      // Predicated region
      $region21: #{cnn_forward.1} parent=11 // pred_check
        %p168 = pneg %p100
      $region22: #{cnn_forward.1} parent=11 // pred_check_branch
        %170 = sbr.rel (%p168) target = $region24
      $region23: #{cnn_forward.1} parent=11 // pred_region
        _
      $region24: #{cnn_forward.1} parent=11 // pred_fallthru
        _
      // Predicated region
      $region25: #{cnn_forward.1} parent=11 // pred_check
        %p171 = pneg %p121
      $region26: #{cnn_forward.1} parent=11 // pred_check_branch
        %173 = sbr.rel (%p171) target = $region28
      $region27: #{cnn_forward.1} parent=11 // pred_region
        _
      $region28: #{cnn_forward.1} parent=11 // pred_fallthru
        _
    $region12: #{cnn_forward.1} parent=5 // pred_fallthru
      _
    %p174 = scmp.lt.s32.totalorder %s11, 2
    // Predicated region
    $region29: #{cnn_forward.1} parent=5 // pred_check
      %p175 = pneg %p174
    $region30: #{cnn_forward.1} parent=5 // pred_check_branch
      %177 = sbr.rel (%p175) target = $region32
    $region31: #{cnn_forward.1} parent=5 // pred_region
      // Predicated region
      $region33: #{cnn_forward.1} parent=31 // pred_check
        %p178 = pneg %p31
      $region34: #{cnn_forward.1} parent=31 // pred_check_branch
        %180 = sbr.rel (%p178) target = $region36
      $region35: #{cnn_forward.1} parent=31 // pred_region
        %p181 = scmp.lt.s32.totalorder %s11, 1
        %s182 = scalar_select %p181, %s11, 1
        %s183 = smul.addr %s182, 32
        %s184 = smul.addr %s183, 8
        %s185 = scalar_lea.vmem %s0, %s184
      $region36: #{cnn_forward.1} parent=31 // pred_fallthru
        _
    $region32: #{cnn_forward.1} parent=5 // pred_fallthru
      _
    %p186 = scmp.le.s32.totalorder 1, %s11
    %p187 = scmp.lt.s32.totalorder %s11, 3
    %p188 = pnand %p186, %p187
    %p189 = pneg %p188
    // Predicated region
    $region37: #{cnn_forward.1} parent=5 // pred_check
      _
    $region38: #{cnn_forward.1} parent=5 // pred_check_branch
      %191 = sbr.rel (%p188) target = $region40
    $region39: #{cnn_forward.1} parent=5 // pred_region
      %s192 = ssub.s32 %s11, 1
      %p193 = scmp.lt.s32.totalorder %s16, 1
      %s194 = scalar_select %p193, %s16, 1
      %s195 = smul.addr %s194, 32
      %s196 = smul.addr %s195, 8
      %s197 = scalar_lea.vmem %s0, %s196
      %p198 = pneg %p37
      %p199 = pneg %p34
      %p200 = pneg %p58
      %p201 = pneg %p55
      %p202 = pneg %p79
      %p203 = pneg %p76
      %p204 = pneg %p100
      %p205 = pneg %p97
      %p206 = pneg %p121
      %p207 = pneg %p118
      %p208 = pneg %p147
      %p209 = pneg %p144
      %p210 = scmp.lt.s32.totalorder %s16, 1
      %s211 = scalar_select %p210, %s16, 1
      %s212 = smul.addr %s211, 8
      %s213 = scalar_lea.vmem %s5, %s212
      %p214 = scmp.lt.s32.totalorder %s16, 1
      %s215 = scalar_select %p214, %s16, 1
      %s216 = smul.addr %s215, 32
      %s217 = smul.addr %s216, 8
      %s218 = scalar_lea.vmem %s0, %s217
      %p219 = scmp.lt.s32.totalorder %s16, 1
      %s220 = scalar_select %p219, %s16, 1
      %s221 = smul.addr %s220, 8
      %s222 = scalar_lea.vmem %s5, %s221
      %v223 = vld [vmem:[%s218] sm:$0xff]
      %v224 = vld [vmem:[%s218 + $0x8] sm:$0xff]
      %v225 = vld [vmem:[%s218 + $0x10] sm:$0xff]
      %v226 = vld [vmem:[%s218 + $0x18] sm:$0xff]
      %v227 = vld [vmem:[%s218 + $0x20] sm:$0xff]
      %v228 = vld [vmem:[%s218 + $0x28] sm:$0xff]
      %v229 = vld [vmem:[%s218 + $0x30] sm:$0xff]
      %v230 = vld [vmem:[%s218 + $0x38] sm:$0xff]
      %v231 = vld [vmem:[%s218 + $0x40] sm:$0xff]
      %v232 = vld [vmem:[%s218 + $0x48] sm:$0xff]
      %v233 = vld [vmem:[%s218 + $0x50] sm:$0xff]
      %v234 = vld [vmem:[%s218 + $0x58] sm:$0xff]
      %v235 = vld [vmem:[%s218 + $0x60] sm:$0xff]
      %v236 = vld [vmem:[%s218 + $0x68] sm:$0xff]
      %v237 = vld [vmem:[%s218 + $0x70] sm:$0xff]
      %v238 = vld [vmem:[%s218 + $0x78] sm:$0xff]
      %v239 = vld [vmem:[%s218 + $0x80] sm:$0xff]
      %v240 = vld [vmem:[%s218 + $0x88] sm:$0xff]
      %v241 = vld [vmem:[%s218 + $0x90] sm:$0xff]
      %v242 = vld [vmem:[%s218 + $0x98] sm:$0xff]
      %v243 = vld [vmem:[%s218 + $0xa0] sm:$0xff]
      %v244 = vld [vmem:[%s218 + $0xa8] sm:$0xff]
      %v245 = vld [vmem:[%s218 + $0xb0] sm:$0xff]
      %v246 = vld [vmem:[%s218 + $0xb8] sm:$0xff]
      %v247 = vld [vmem:[%s218 + $0xc0] sm:$0x7]
      %v248 = vld [vmem:[%s218 + $0xc8] sm:$0x7]
      %v249 = vld [vmem:[%s218 + $0xd0] sm:$0x7]
      %v250 = vld [vmem:[%s218 + $0xd8] sm:$0x7]
      %v251 = vld [vmem:[%s218 + $0xe0] sm:$0x7]
      %v252 = vld [vmem:[%s218 + $0xe8] sm:$0x7]
      %v253 = vld [vmem:[%s218 + $0xf0] sm:$0x7]
      %v254 = vld [vmem:[%s218 + $0xf8] sm:$0x7]
      %v255 = vld [vmem:[%s1] sm:$0xff]
      %vm256 = vcmask 220160
      %v258 = vsel %vm256, %v255, 0
      %vm260 = vcmask 1042432
      %v262 = vsel %vm260, %v247, 0
      %v265 = vsel %vm260, %v248, 0
      %v268 = vsel %vm260, %v249, 0
      %v271 = vsel %vm260, %v250, 0
      %v274 = vsel %vm260, %v251, 0
      %v277 = vsel %vm260, %v252, 0
      %v280 = vsel %vm260, %v253, 0
      %v283 = vsel %vm260, %v254, 0
      %285 = vmatpush.msra.mxu0 0.0
      %286 = vmatpush.msra.mxu0 0.0
      %287 = vmatpush.msra.mxu0 0.0
      %288 = vmatpush.msra.mxu0 0.0
      %289 = vmatpush.msra.mxu0 0.0
      %290 = vmatpush.msra.mxu0 0.0
      %291 = vmatpush.msra.mxu0 0.0
      %292 = vmatpush.msra.mxu0 0.0
      %293 = vmatpush.msra.mxu0 0.0
      %294 = vmatpush.msra.mxu0 0.0
      %295 = vmatpush.msra.mxu0 0.0
      %296 = vmatpush.msra.mxu0 0.0
      %297 = vmatpush.msra.mxu0 %v262
      %298 = vmatpush.msra.mxu0 %v239
      %299 = vmatpush.msra.mxu0 %v231
      %300 = vmatpush.msra.mxu0 %v223
      %301 = vmatmul.f32.gmra.mxu0 %v258
      %v302 = vpop.f32.mrf.mxu0
      %v303 = vadd.f32 0.0, %v302
      %304 = vdwg.mxu0
      %305 = vmatpush.msra.mxu0 0.0
      %306 = vmatpush.msra.mxu0 0.0
      %307 = vmatpush.msra.mxu0 0.0
      %308 = vmatpush.msra.mxu0 0.0
      %309 = vmatpush.msra.mxu0 0.0
      %310 = vmatpush.msra.mxu0 0.0
      %311 = vmatpush.msra.mxu0 0.0
      %312 = vmatpush.msra.mxu0 0.0
      %313 = vmatpush.msra.mxu0 0.0
      %314 = vmatpush.msra.mxu0 0.0
      %315 = vmatpush.msra.mxu0 0.0
      %316 = vmatpush.msra.mxu0 0.0
      %317 = vmatpush.msra.mxu0 %v265
      %318 = vmatpush.msra.mxu0 %v240
      %319 = vmatpush.msra.mxu0 %v232
      %320 = vmatpush.msra.mxu0 %v224
      %321 = vmatmul.f32.gmra.mxu0 %v258
      %v322 = vpop.f32.mrf.mxu0
      %v323 = vadd.f32 0.0, %v322
      %324 = vdwg.mxu0
      %325 = vmatpush.msra.mxu0 0.0
      %326 = vmatpush.msra.mxu0 0.0
      %327 = vmatpush.msra.mxu0 0.0
      %328 = vmatpush.msra.mxu0 0.0
      %329 = vmatpush.msra.mxu0 0.0
      %330 = vmatpush.msra.mxu0 0.0
      %331 = vmatpush.msra.mxu0 0.0
      %332 = vmatpush.msra.mxu0 0.0
      %333 = vmatpush.msra.mxu0 0.0
      %334 = vmatpush.msra.mxu0 0.0
      %335 = vmatpush.msra.mxu0 0.0
      %336 = vmatpush.msra.mxu0 0.0
      %337 = vmatpush.msra.mxu0 %v268
      %338 = vmatpush.msra.mxu0 %v241
      %339 = vmatpush.msra.mxu0 %v233
      %340 = vmatpush.msra.mxu0 %v225
      %341 = vmatmul.f32.gmra.mxu0 %v258
      %v342 = vpop.f32.mrf.mxu0
      %v343 = vadd.f32 0.0, %v342
      %344 = vdwg.mxu0
      %345 = vmatpush.msra.mxu0 0.0
      %346 = vmatpush.msra.mxu0 0.0
      %347 = vmatpush.msra.mxu0 0.0
      %348 = vmatpush.msra.mxu0 0.0
      %349 = vmatpush.msra.mxu0 0.0
      %350 = vmatpush.msra.mxu0 0.0
      %351 = vmatpush.msra.mxu0 0.0
      %352 = vmatpush.msra.mxu0 0.0
      %353 = vmatpush.msra.mxu0 0.0
      %354 = vmatpush.msra.mxu0 0.0
      %355 = vmatpush.msra.mxu0 0.0
      %356 = vmatpush.msra.mxu0 0.0
      %357 = vmatpush.msra.mxu0 %v271
      %358 = vmatpush.msra.mxu0 %v242
      %359 = vmatpush.msra.mxu0 %v234
      %360 = vmatpush.msra.mxu0 %v226
      %361 = vmatmul.f32.gmra.mxu0 %v258
      %v362 = vpop.f32.mrf.mxu0
      %v363 = vadd.f32 0.0, %v362
      %364 = vdwg.mxu0
      %365 = vmatpush.msra.mxu0 0.0
      %366 = vmatpush.msra.mxu0 0.0
      %367 = vmatpush.msra.mxu0 0.0
      %368 = vmatpush.msra.mxu0 0.0
      %369 = vmatpush.msra.mxu0 0.0
      %370 = vmatpush.msra.mxu0 0.0
      %371 = vmatpush.msra.mxu0 0.0
      %372 = vmatpush.msra.mxu0 0.0
      %373 = vmatpush.msra.mxu0 0.0
      %374 = vmatpush.msra.mxu0 0.0
      %375 = vmatpush.msra.mxu0 0.0
      %376 = vmatpush.msra.mxu0 0.0
      %377 = vmatpush.msra.mxu0 %v274
      %378 = vmatpush.msra.mxu0 %v243
      %379 = vmatpush.msra.mxu0 %v235
      %380 = vmatpush.msra.mxu0 %v227
      %381 = vmatmul.f32.gmra.mxu0 %v258
      %v382 = vpop.f32.mrf.mxu0
      %v383 = vadd.f32 0.0, %v382
      %384 = vdwg.mxu0
      %385 = vmatpush.msra.mxu0 0.0
      %386 = vmatpush.msra.mxu0 0.0
      %387 = vmatpush.msra.mxu0 0.0
      %388 = vmatpush.msra.mxu0 0.0
      %389 = vmatpush.msra.mxu0 0.0
      %390 = vmatpush.msra.mxu0 0.0
      %391 = vmatpush.msra.mxu0 0.0
      %392 = vmatpush.msra.mxu0 0.0
      %393 = vmatpush.msra.mxu0 0.0
      %394 = vmatpush.msra.mxu0 0.0
      %395 = vmatpush.msra.mxu0 0.0
      %396 = vmatpush.msra.mxu0 0.0
      %397 = vmatpush.msra.mxu0 %v277
      %398 = vmatpush.msra.mxu0 %v244
      %399 = vmatpush.msra.mxu0 %v236
      %400 = vmatpush.msra.mxu0 %v228
      %401 = vmatmul.f32.gmra.mxu0 %v258
      %v402 = vpop.f32.mrf.mxu0
      %v403 = vadd.f32 0.0, %v402
      %404 = vdwg.mxu0
      %405 = vmatpush.msra.mxu0 0.0
      %406 = vmatpush.msra.mxu0 0.0
      %407 = vmatpush.msra.mxu0 0.0
      %408 = vmatpush.msra.mxu0 0.0
      %409 = vmatpush.msra.mxu0 0.0
      %410 = vmatpush.msra.mxu0 0.0
      %411 = vmatpush.msra.mxu0 0.0
      %412 = vmatpush.msra.mxu0 0.0
      %413 = vmatpush.msra.mxu0 0.0
      %414 = vmatpush.msra.mxu0 0.0
      %415 = vmatpush.msra.mxu0 0.0
      %416 = vmatpush.msra.mxu0 0.0
      %417 = vmatpush.msra.mxu0 %v280
      %418 = vmatpush.msra.mxu0 %v245
      %419 = vmatpush.msra.mxu0 %v237
      %420 = vmatpush.msra.mxu0 %v229
      %421 = vmatmul.f32.gmra.mxu0 %v258
      %v422 = vpop.f32.mrf.mxu0
      %v423 = vadd.f32 0.0, %v422
      %424 = vdwg.mxu0
      %425 = vmatpush.msra.mxu0 0.0
      %426 = vmatpush.msra.mxu0 0.0
      %427 = vmatpush.msra.mxu0 0.0
      %428 = vmatpush.msra.mxu0 0.0
      %429 = vmatpush.msra.mxu0 0.0
      %430 = vmatpush.msra.mxu0 0.0
      %431 = vmatpush.msra.mxu0 0.0
      %432 = vmatpush.msra.mxu0 0.0
      %433 = vmatpush.msra.mxu0 0.0
      %434 = vmatpush.msra.mxu0 0.0
      %435 = vmatpush.msra.mxu0 0.0
      %436 = vmatpush.msra.mxu0 0.0
      %437 = vmatpush.msra.mxu0 %v283
      %438 = vmatpush.msra.mxu0 %v246
      %439 = vmatpush.msra.mxu0 %v238
      %440 = vmatpush.msra.mxu0 %v230
      %441 = vmatmul.f32.gmra.mxu0 %v258
      %v442 = vpop.f32.mrf.mxu0
      %v443 = vadd.f32 0.0, %v442
      %444 = vdwg.mxu0
      %v445 = vtanh.pop %v303
      %v446 = vtanh.pop %v323
      %v447 = vtanh.pop %v343
      %v448 = vtanh.pop %v363
      %v449 = vtanh.pop %v383
      %v450 = vtanh.pop %v403
      %v451 = vtanh.pop %v423
      %v452 = vtanh.pop %v443
      %461 = vrot.lane.b32.xlu0 %v445, 98
      %v462 = vpop.permute.xlu0 %461
      %463 = vrot.lane.b32.xlu0 %v446, 98
      %v464 = vpop.permute.xlu0 %463
      %465 = vrot.lane.b32.xlu0 %v447, 98
      %v466 = vpop.permute.xlu0 %465
      %467 = vrot.lane.b32.xlu0 %v448, 98
      %v468 = vpop.permute.xlu0 %467
      %469 = vrot.lane.b32.xlu0 %v449, 98
      %v470 = vpop.permute.xlu0 %469
      %471 = vrot.lane.b32.xlu0 %v450, 98
      %v472 = vpop.permute.xlu0 %471
      %473 = vrot.lane.b32.xlu0 %v451, 98
      %v474 = vpop.permute.xlu0 %473
      %475 = vrot.lane.b32.xlu0 %v452, 98
      %v476 = vpop.permute.xlu0 %475
      %vm477 = vcmask 801792
      %v478 = vsel %vm477, %v462, %v464
      %v479 = vsel %vm477, %v464, %v466
      %v480 = vsel %vm477, %v466, %v468
      %v481 = vsel %vm477, %v468, %v470
      %v482 = vsel %vm477, %v470, %v472
      %v483 = vsel %vm477, %v472, %v474
      %v484 = vsel %vm477, %v474, %v476
      %v492 = vmax.f32 %v445, %v478
      %v493 = vmax.f32 %v446, %v479
      %v494 = vmax.f32 %v447, %v480
      %v495 = vmax.f32 %v448, %v481
      %v496 = vmax.f32 %v449, %v482
      %v497 = vmax.f32 %v450, %v483
      %v498 = vmax.f32 %v451, %v484
      %506 = vrot.lane.b32.xlu0 %v492, 127
      %v507 = vpop.permute.xlu0 %506
      %508 = vrot.lane.b32.xlu0 %v493, 127
      %v509 = vpop.permute.xlu0 %508
      %510 = vrot.lane.b32.xlu0 %v494, 127
      %v511 = vpop.permute.xlu0 %510
      %512 = vrot.lane.b32.xlu0 %v495, 127
      %v513 = vpop.permute.xlu0 %512
      %514 = vrot.lane.b32.xlu0 %v496, 127
      %v515 = vpop.permute.xlu0 %514
      %516 = vrot.lane.b32.xlu0 %v497, 127
      %v517 = vpop.permute.xlu0 %516
      %518 = vrot.lane.b32.xlu0 %v498, 127
      %v519 = vpop.permute.xlu0 %518
      %vm520 = vcmask 1039360
      %v521 = vsel %vm520, %v507, %v509
      %v522 = vsel %vm520, %v509, %v511
      %v523 = vsel %vm520, %v511, %v513
      %v524 = vsel %vm520, %v513, %v515
      %v525 = vsel %vm520, %v515, %v517
      %v526 = vsel %vm520, %v517, %v519
      %v534 = vmax.f32 %v492, %v521
      %v535 = vmax.f32 %v493, %v522
      %v536 = vmax.f32 %v494, %v523
      %v537 = vmax.f32 %v495, %v524
      %v538 = vmax.f32 %v496, %v525
      %v539 = vmax.f32 %v497, %v526
      %v540 = vmax.f32 %v498, %v519
      %v541 = vld [vmem:[%s3] sm:$0xff]
      %v542 = vld [vmem:[%s3 + $0x8] sm:$0xff]
      %v543 = vld [vmem:[%s3 + $0x10] sm:$0xff]
      %v544 = vld [vmem:[%s3 + $0x18] sm:$0xff]
      %v545 = vld [vmem:[%s3 + $0x20] sm:$0xff]
      %v546 = vld [vmem:[%s3 + $0x28] sm:$0xff]
      %v547 = vld [vmem:[%s3 + $0x30] sm:$0xff]
      %v548 = vld [vmem:[%s3 + $0x38] sm:$0xff]
      %v549 = vld [vmem:[%s3 + $0x40] sm:$0xff]
      %v550 = vld [vmem:[%s3 + $0x48] sm:$0xff]
      %v551 = vld [vmem:[%s3 + $0x50] sm:$0xff]
      %v552 = vld [vmem:[%s3 + $0x58] sm:$0xff]
      %v553 = vld [vmem:[%s3 + $0x60] sm:$0xff]
      %v554 = vld [vmem:[%s3 + $0x68] sm:$0xff]
      %v555 = vld [vmem:[%s3 + $0x70] sm:$0xff]
      %v556 = vld [vmem:[%s3 + $0x78] sm:$0xff]
      %v557 = vld [vmem:[%s3 + $0x80] sm:$0xff]
      %v558 = vld [vmem:[%s3 + $0x88] sm:$0xff]
      %v559 = vld [vmem:[%s3 + $0x90] sm:$0xff]
      %v560 = vld [vmem:[%s3 + $0x98] sm:$0xff]
      %v561 = vld [vmem:[%s3 + $0xa0] sm:$0xff]
      %v562 = vld [vmem:[%s3 + $0xa8] sm:$0xff]
      %v563 = vld [vmem:[%s3 + $0xb0] sm:$0xff]
      %v564 = vld [vmem:[%s3 + $0xb8] sm:$0xff]
      %v565 = vld [vmem:[%s3 + $0xc0] sm:$0xff]
      %v566 = vld [vmem:[%s3 + $0xc8] sm:$0xff]
      %v567 = vld [vmem:[%s3 + $0xd0] sm:$0xff]
      %v568 = vld [vmem:[%s3 + $0xd8] sm:$0xff]
      %v569 = vld [vmem:[%s3 + $0xe0] sm:$0xff]
      %v570 = vld [vmem:[%s3 + $0xe8] sm:$0xff]
      %v571 = vld [vmem:[%s3 + $0xf0] sm:$0xff]
      %v572 = vld [vmem:[%s3 + $0xf8] sm:$0xff]
      %v573 = vld [vmem:[%s3 + $0x100] sm:$0xff]
      %v574 = vld [vmem:[%s3 + $0x108] sm:$0xff]
      %v575 = vld [vmem:[%s3 + $0x110] sm:$0xff]
      %v576 = vld [vmem:[%s3 + $0x118] sm:$0xff]
      %v577 = vld [vmem:[%s3 + $0x120] sm:$0xff]
      %v578 = vld [vmem:[%s3 + $0x128] sm:$0xff]
      %v579 = vld [vmem:[%s3 + $0x130] sm:$0xff]
      %v580 = vld [vmem:[%s3 + $0x138] sm:$0xff]
      %v581 = vld [vmem:[%s3 + $0x140] sm:$0xff]
      %v582 = vld [vmem:[%s3 + $0x148] sm:$0xff]
      %v583 = vld [vmem:[%s3 + $0x150] sm:$0xff]
      %v584 = vld [vmem:[%s3 + $0x158] sm:$0xff]
      %v585 = vld [vmem:[%s3 + $0x160] sm:$0xff]
      %v586 = vld [vmem:[%s3 + $0x168] sm:$0xff]
      %v587 = vld [vmem:[%s3 + $0x170] sm:$0xff]
      %v588 = vld [vmem:[%s3 + $0x178] sm:$0xff]
      %v589 = vld [vmem:[%s3 + $0x180] sm:$0xff]
      %v590 = vld [vmem:[%s3 + $0x188] sm:$0xff]
      %v591 = vld [vmem:[%s3 + $0x190] sm:$0xff]
      %v592 = vld [vmem:[%s3 + $0x198] sm:$0xff]
      %v593 = vld [vmem:[%s3 + $0x1a0] sm:$0xff]
      %v594 = vld [vmem:[%s3 + $0x1a8] sm:$0xff]
      %v595 = vld [vmem:[%s3 + $0x1b0] sm:$0xff]
      %v596 = vld [vmem:[%s3 + $0x1b8] sm:$0xff]
      %v597 = vld [vmem:[%s3 + $0x1c0] sm:$0xff]
      %v598 = vld [vmem:[%s3 + $0x1c8] sm:$0xff]
      %v599 = vld [vmem:[%s3 + $0x1d0] sm:$0xff]
      %v600 = vld [vmem:[%s3 + $0x1d8] sm:$0xff]
      %v601 = vld [vmem:[%s3 + $0x1e0] sm:$0xff]
      %v602 = vld [vmem:[%s3 + $0x1e8] sm:$0xff]
      %v603 = vld [vmem:[%s3 + $0x1f0] sm:$0xff]
      %v604 = vld [vmem:[%s3 + $0x1f8] sm:$0xff]
      %v605 = vld [vmem:[%s3 + $0x200] sm:$0xff]
      %v606 = vld [vmem:[%s3 + $0x208] sm:$0xff]
      %v607 = vld [vmem:[%s3 + $0x210] sm:$0xff]
      %v608 = vld [vmem:[%s3 + $0x218] sm:$0xff]
      %v609 = vld [vmem:[%s3 + $0x220] sm:$0xff]
      %v610 = vld [vmem:[%s3 + $0x228] sm:$0xff]
      %v611 = vld [vmem:[%s3 + $0x230] sm:$0xff]
      %v612 = vld [vmem:[%s3 + $0x238] sm:$0xff]
      %v613 = vld [vmem:[%s3 + $0x240] sm:$0xff]
      %v614 = vld [vmem:[%s3 + $0x248] sm:$0xff]
      %v615 = vld [vmem:[%s3 + $0x250] sm:$0xff]
      %v616 = vld [vmem:[%s3 + $0x258] sm:$0xff]
      %v617 = vld [vmem:[%s3 + $0x260] sm:$0xff]
      %v618 = vld [vmem:[%s3 + $0x268] sm:$0xff]
      %v619 = vld [vmem:[%s3 + $0x270] sm:$0xff]
      %v620 = vld [vmem:[%s3 + $0x278] sm:$0xff]
      %v621 = vld [vmem:[%s3 + $0x280] sm:$0xff]
      %v622 = vld [vmem:[%s3 + $0x288] sm:$0xff]
      %v623 = vld [vmem:[%s3 + $0x290] sm:$0xff]
      %v624 = vld [vmem:[%s3 + $0x298] sm:$0xff]
      %v625 = vld [vmem:[%s3 + $0x2a0] sm:$0xff]
      %v626 = vld [vmem:[%s3 + $0x2a8] sm:$0xff]
      %v627 = vld [vmem:[%s3 + $0x2b0] sm:$0xff]
      %v628 = vld [vmem:[%s3 + $0x2b8] sm:$0xff]
      %v629 = vld [vmem:[%s3 + $0x2c0] sm:$0xff]
      %v630 = vld [vmem:[%s3 + $0x2c8] sm:$0xff]
      %v631 = vld [vmem:[%s3 + $0x2d0] sm:$0xff]
      %v632 = vld [vmem:[%s3 + $0x2d8] sm:$0xff]
      %v633 = vld [vmem:[%s3 + $0x2e0] sm:$0xff]
      %v634 = vld [vmem:[%s3 + $0x2e8] sm:$0xff]
      %v635 = vld [vmem:[%s3 + $0x2f0] sm:$0xff]
      %v636 = vld [vmem:[%s3 + $0x2f8] sm:$0xff]
      %v637 = vld [vmem:[%s3 + $0x300] sm:$0xff]
      %v638 = vld [vmem:[%s3 + $0x308] sm:$0xff]
      %v639 = vld [vmem:[%s3 + $0x310] sm:$0xff]
      %v640 = vld [vmem:[%s3 + $0x318] sm:$0xff]
      %v641 = vld [vmem:[%s3 + $0x320] sm:$0xff]
      %v642 = vld [vmem:[%s3 + $0x328] sm:$0xff]
      %v643 = vld [vmem:[%s3 + $0x330] sm:$0xff]
      %v644 = vld [vmem:[%s3 + $0x338] sm:$0xff]
      %v645 = vld [vmem:[%s3 + $0x340] sm:$0xff]
      %v646 = vld [vmem:[%s3 + $0x348] sm:$0xff]
      %v647 = vld [vmem:[%s3 + $0x350] sm:$0xff]
      %v648 = vld [vmem:[%s3 + $0x358] sm:$0xff]
      %v649 = vld [vmem:[%s3 + $0x360] sm:$0xff]
      %v650 = vld [vmem:[%s3 + $0x368] sm:$0xff]
      %v651 = vld [vmem:[%s3 + $0x370] sm:$0xff]
      %v652 = vld [vmem:[%s3 + $0x378] sm:$0xff]
      %v653 = vld [vmem:[%s3 + $0x380] sm:$0xff]
      %v654 = vld [vmem:[%s3 + $0x388] sm:$0xff]
      %v655 = vld [vmem:[%s3 + $0x390] sm:$0xff]
      %v656 = vld [vmem:[%s3 + $0x398] sm:$0xff]
      %v657 = vld [vmem:[%s3 + $0x3a0] sm:$0xff]
      %v658 = vld [vmem:[%s3 + $0x3a8] sm:$0xff]
      %v659 = vld [vmem:[%s3 + $0x3b0] sm:$0xff]
      %v660 = vld [vmem:[%s3 + $0x3b8] sm:$0xff]
      %v661 = vld [vmem:[%s3 + $0x3c0] sm:$0xff]
      %v662 = vld [vmem:[%s3 + $0x3c8] sm:$0xff]
      %v663 = vld [vmem:[%s3 + $0x3d0] sm:$0xff]
      %v664 = vld [vmem:[%s3 + $0x3d8] sm:$0xff]
      %v665 = vld [vmem:[%s3 + $0x3e0] sm:$0xff]
      %v666 = vld [vmem:[%s3 + $0x3e8] sm:$0xff]
      %v667 = vld [vmem:[%s3 + $0x3f0] sm:$0xff]
      %v668 = vld [vmem:[%s3 + $0x3f8] sm:$0xff]
      %v669 = vld [vmem:[%s3 + $0x400] sm:$0xff]
      %v670 = vld [vmem:[%s3 + $0x408] sm:$0xff]
      %v671 = vld [vmem:[%s3 + $0x410] sm:$0xff]
      %v672 = vld [vmem:[%s3 + $0x418] sm:$0xff]
      %v673 = vld [vmem:[%s3 + $0x420] sm:$0xff]
      %v674 = vld [vmem:[%s3 + $0x428] sm:$0xff]
      %v675 = vld [vmem:[%s3 + $0x430] sm:$0xff]
      %v676 = vld [vmem:[%s3 + $0x438] sm:$0xff]
      %v677 = vld [vmem:[%s3 + $0x440] sm:$0xff]
      %v678 = vld [vmem:[%s3 + $0x448] sm:$0xff]
      %v679 = vld [vmem:[%s3 + $0x450] sm:$0xff]
      %v680 = vld [vmem:[%s3 + $0x458] sm:$0xff]
      %v681 = vld [vmem:[%s3 + $0x460] sm:$0xff]
      %v682 = vld [vmem:[%s3 + $0x468] sm:$0xff]
      %v683 = vld [vmem:[%s3 + $0x470] sm:$0xff]
      %v684 = vld [vmem:[%s3 + $0x478] sm:$0xff]
      %v685 = vld [vmem:[%s3 + $0x480] sm:$0xff]
      %v686 = vld [vmem:[%s3 + $0x488] sm:$0xff]
      %v687 = vld [vmem:[%s3 + $0x490] sm:$0xff]
      %v688 = vld [vmem:[%s3 + $0x498] sm:$0xff]
      %v689 = vld [vmem:[%s3 + $0x4a0] sm:$0xff]
      %v690 = vld [vmem:[%s3 + $0x4a8] sm:$0xff]
      %v691 = vld [vmem:[%s3 + $0x4b0] sm:$0xff]
      %v692 = vld [vmem:[%s3 + $0x4b8] sm:$0xff]
      %v693 = vld [vmem:[%s3 + $0x4c0] sm:$0xff]
      %v694 = vld [vmem:[%s3 + $0x4c8] sm:$0xff]
      %v695 = vld [vmem:[%s3 + $0x4d0] sm:$0xff]
      %v696 = vld [vmem:[%s3 + $0x4d8] sm:$0xff]
      %v697 = vld [vmem:[%s3 + $0x4e0] sm:$0xff]
      %v698 = vld [vmem:[%s3 + $0x4e8] sm:$0xff]
      %v699 = vld [vmem:[%s3 + $0x4f0] sm:$0xff]
      %v700 = vld [vmem:[%s3 + $0x4f8] sm:$0xff]
      %v701 = vld [vmem:[%s3 + $0x500] sm:$0xff]
      %v702 = vld [vmem:[%s3 + $0x508] sm:$0xff]
      %v703 = vld [vmem:[%s3 + $0x510] sm:$0xff]
      %v704 = vld [vmem:[%s3 + $0x518] sm:$0xff]
      %v705 = vld [vmem:[%s3 + $0x520] sm:$0xff]
      %v706 = vld [vmem:[%s3 + $0x528] sm:$0xff]
      %v707 = vld [vmem:[%s3 + $0x530] sm:$0xff]
      %v708 = vld [vmem:[%s3 + $0x538] sm:$0xff]
      %v709 = vld [vmem:[%s3 + $0x540] sm:$0xff]
      %v710 = vld [vmem:[%s3 + $0x548] sm:$0xff]
      %v711 = vld [vmem:[%s3 + $0x550] sm:$0xff]
      %v712 = vld [vmem:[%s3 + $0x558] sm:$0xff]
      %v713 = vld [vmem:[%s3 + $0x560] sm:$0xff]
      %v714 = vld [vmem:[%s3 + $0x568] sm:$0xff]
      %v715 = vld [vmem:[%s3 + $0x570] sm:$0xff]
      %v716 = vld [vmem:[%s3 + $0x578] sm:$0xff]
      %v717 = vld [vmem:[%s3 + $0x580] sm:$0xff]
      %v718 = vld [vmem:[%s3 + $0x588] sm:$0xff]
      %v719 = vld [vmem:[%s3 + $0x590] sm:$0xff]
      %v720 = vld [vmem:[%s3 + $0x598] sm:$0xff]
      %v721 = vld [vmem:[%s3 + $0x5a0] sm:$0xff]
      %v722 = vld [vmem:[%s3 + $0x5a8] sm:$0xff]
      %v723 = vld [vmem:[%s3 + $0x5b0] sm:$0xff]
      %v724 = vld [vmem:[%s3 + $0x5b8] sm:$0xff]
      %v725 = vld [vmem:[%s3 + $0x5c0] sm:$0xff]
      %v726 = vld [vmem:[%s3 + $0x5c8] sm:$0xff]
      %v727 = vld [vmem:[%s3 + $0x5d0] sm:$0xff]
      %v728 = vld [vmem:[%s3 + $0x5d8] sm:$0xff]
      %v729 = vld [vmem:[%s3 + $0x5e0] sm:$0xff]
      %v730 = vld [vmem:[%s3 + $0x5e8] sm:$0xff]
      %v731 = vld [vmem:[%s3 + $0x5f0] sm:$0xff]
      %v732 = vld [vmem:[%s3 + $0x5f8] sm:$0xff]
      %v733 = vld [vmem:[%s3 + $0x600] sm:$0xff]
      %v734 = vld [vmem:[%s3 + $0x608] sm:$0xff]
      %v735 = vld [vmem:[%s3 + $0x610] sm:$0xff]
      %v736 = vld [vmem:[%s3 + $0x618] sm:$0xff]
      %v737 = vld [vmem:[%s3 + $0x620] sm:$0xff]
      %v738 = vld [vmem:[%s3 + $0x628] sm:$0xff]
      %v739 = vld [vmem:[%s3 + $0x630] sm:$0xff]
      %v740 = vld [vmem:[%s3 + $0x638] sm:$0xff]
      %v741 = vld [vmem:[%s3 + $0x640] sm:$0xff]
      %v742 = vld [vmem:[%s3 + $0x648] sm:$0xff]
      %v743 = vld [vmem:[%s3 + $0x650] sm:$0xff]
      %v744 = vld [vmem:[%s3 + $0x658] sm:$0xff]
      %v745 = vld [vmem:[%s3 + $0x660] sm:$0xff]
      %v746 = vld [vmem:[%s3 + $0x668] sm:$0xff]
      %v747 = vld [vmem:[%s3 + $0x670] sm:$0xff]
      %v748 = vld [vmem:[%s3 + $0x678] sm:$0xff]
      %v749 = vld [vmem:[%s3 + $0x680] sm:$0xff]
      %v750 = vld [vmem:[%s3 + $0x688] sm:$0xff]
      %v751 = vld [vmem:[%s3 + $0x690] sm:$0xff]
      %v752 = vld [vmem:[%s3 + $0x698] sm:$0xff]
      %v753 = vld [vmem:[%s3 + $0x6a0] sm:$0xff]
      %v754 = vld [vmem:[%s3 + $0x6a8] sm:$0xff]
      %v755 = vld [vmem:[%s3 + $0x6b0] sm:$0xff]
      %v756 = vld [vmem:[%s3 + $0x6b8] sm:$0xff]
      %v757 = vld [vmem:[%s3 + $0x6c0] sm:$0x1f]
      %v758 = vld [vmem:[%s3 + $0x6c8] sm:$0x1f]
      %vm759 = vcmask 826368
      %v761 = vsel %vm759, %v540, 0
      %vm763 = vcmask 1044480
      %v765 = vsel %vm763, %v757, 0
      %v768 = vsel %vm763, %v758, 0
      %770 = vmatpush.msra.mxu0 %v571
      %771 = vmatpush.msra.mxu0 %v569
      %772 = vmatpush.msra.mxu0 %v567
      %773 = vmatpush.msra.mxu0 %v565
      %774 = vmatpush.msra.mxu0 %v563
      %775 = vmatpush.msra.mxu0 %v561
      %776 = vmatpush.msra.mxu0 %v559
      %777 = vmatpush.msra.mxu0 %v557
      %778 = vmatpush.msra.mxu0 %v555
      %779 = vmatpush.msra.mxu0 %v553
      %780 = vmatpush.msra.mxu0 %v551
      %781 = vmatpush.msra.mxu0 %v549
      %782 = vmatpush.msra.mxu0 %v547
      %783 = vmatpush.msra.mxu0 %v545
      %784 = vmatpush.msra.mxu0 %v543
      %785 = vmatpush.msra.mxu0 %v541
      %786 = vmatmul.f32.gmra.mxu0 %v534
      %v787 = vpop.f32.mrf.mxu0
      %v788 = vadd.f32 0.0, %v787
      %789 = vdwg.mxu0
      %790 = vmatpush.msra.mxu0 %v603
      %791 = vmatpush.msra.mxu0 %v601
      %792 = vmatpush.msra.mxu0 %v599
      %793 = vmatpush.msra.mxu0 %v597
      %794 = vmatpush.msra.mxu0 %v595
      %795 = vmatpush.msra.mxu0 %v593
      %796 = vmatpush.msra.mxu0 %v591
      %797 = vmatpush.msra.mxu0 %v589
      %798 = vmatpush.msra.mxu0 %v587
      %799 = vmatpush.msra.mxu0 %v585
      %800 = vmatpush.msra.mxu0 %v583
      %801 = vmatpush.msra.mxu0 %v581
      %802 = vmatpush.msra.mxu0 %v579
      %803 = vmatpush.msra.mxu0 %v577
      %804 = vmatpush.msra.mxu0 %v575
      %805 = vmatpush.msra.mxu0 %v573
      %806 = vmatmul.f32.gmra.mxu0 %v535
      %v807 = vpop.f32.mrf.mxu0
      %v808 = vadd.f32 %v788, %v807
      %809 = vdwg.mxu0
      %810 = vmatpush.msra.mxu0 %v635
      %811 = vmatpush.msra.mxu0 %v633
      %812 = vmatpush.msra.mxu0 %v631
      %813 = vmatpush.msra.mxu0 %v629
      %814 = vmatpush.msra.mxu0 %v627
      %815 = vmatpush.msra.mxu0 %v625
      %816 = vmatpush.msra.mxu0 %v623
      %817 = vmatpush.msra.mxu0 %v621
      %818 = vmatpush.msra.mxu0 %v619
      %819 = vmatpush.msra.mxu0 %v617
      %820 = vmatpush.msra.mxu0 %v615
      %821 = vmatpush.msra.mxu0 %v613
      %822 = vmatpush.msra.mxu0 %v611
      %823 = vmatpush.msra.mxu0 %v609
      %824 = vmatpush.msra.mxu0 %v607
      %825 = vmatpush.msra.mxu0 %v605
      %826 = vmatmul.f32.gmra.mxu0 %v536
      %v827 = vpop.f32.mrf.mxu0
      %v828 = vadd.f32 %v808, %v827
      %829 = vdwg.mxu0
      %830 = vmatpush.msra.mxu0 %v667
      %831 = vmatpush.msra.mxu0 %v665
      %832 = vmatpush.msra.mxu0 %v663
      %833 = vmatpush.msra.mxu0 %v661
      %834 = vmatpush.msra.mxu0 %v659
      %835 = vmatpush.msra.mxu0 %v657
      %836 = vmatpush.msra.mxu0 %v655
      %837 = vmatpush.msra.mxu0 %v653
      %838 = vmatpush.msra.mxu0 %v651
      %839 = vmatpush.msra.mxu0 %v649
      %840 = vmatpush.msra.mxu0 %v647
      %841 = vmatpush.msra.mxu0 %v645
      %842 = vmatpush.msra.mxu0 %v643
      %843 = vmatpush.msra.mxu0 %v641
      %844 = vmatpush.msra.mxu0 %v639
      %845 = vmatpush.msra.mxu0 %v637
      %846 = vmatmul.f32.gmra.mxu0 %v537
      %v847 = vpop.f32.mrf.mxu0
      %v848 = vadd.f32 %v828, %v847
      %849 = vdwg.mxu0
      %850 = vmatpush.msra.mxu0 %v699
      %851 = vmatpush.msra.mxu0 %v697
      %852 = vmatpush.msra.mxu0 %v695
      %853 = vmatpush.msra.mxu0 %v693
      %854 = vmatpush.msra.mxu0 %v691
      %855 = vmatpush.msra.mxu0 %v689
      %856 = vmatpush.msra.mxu0 %v687
      %857 = vmatpush.msra.mxu0 %v685
      %858 = vmatpush.msra.mxu0 %v683
      %859 = vmatpush.msra.mxu0 %v681
      %860 = vmatpush.msra.mxu0 %v679
      %861 = vmatpush.msra.mxu0 %v677
      %862 = vmatpush.msra.mxu0 %v675
      %863 = vmatpush.msra.mxu0 %v673
      %864 = vmatpush.msra.mxu0 %v671
      %865 = vmatpush.msra.mxu0 %v669
      %866 = vmatmul.f32.gmra.mxu0 %v538
      %v867 = vpop.f32.mrf.mxu0
      %v868 = vadd.f32 %v848, %v867
      %869 = vdwg.mxu0
      %870 = vmatpush.msra.mxu0 %v731
      %871 = vmatpush.msra.mxu0 %v729
      %872 = vmatpush.msra.mxu0 %v727
      %873 = vmatpush.msra.mxu0 %v725
      %874 = vmatpush.msra.mxu0 %v723
      %875 = vmatpush.msra.mxu0 %v721
      %876 = vmatpush.msra.mxu0 %v719
      %877 = vmatpush.msra.mxu0 %v717
      %878 = vmatpush.msra.mxu0 %v715
      %879 = vmatpush.msra.mxu0 %v713
      %880 = vmatpush.msra.mxu0 %v711
      %881 = vmatpush.msra.mxu0 %v709
      %882 = vmatpush.msra.mxu0 %v707
      %883 = vmatpush.msra.mxu0 %v705
      %884 = vmatpush.msra.mxu0 %v703
      %885 = vmatpush.msra.mxu0 %v701
      %886 = vmatmul.f32.gmra.mxu0 %v539
      %v887 = vpop.f32.mrf.mxu0
      %v888 = vadd.f32 %v868, %v887
      %889 = vdwg.mxu0
      %890 = vmatpush.msra.mxu0 0.0
      %891 = vmatpush.msra.mxu0 0.0
      %892 = vmatpush.msra.mxu0 0.0
      %893 = vmatpush.msra.mxu0 %v765
      %894 = vmatpush.msra.mxu0 %v755
      %895 = vmatpush.msra.mxu0 %v753
      %896 = vmatpush.msra.mxu0 %v751
      %897 = vmatpush.msra.mxu0 %v749
      %898 = vmatpush.msra.mxu0 %v747
      %899 = vmatpush.msra.mxu0 %v745
      %900 = vmatpush.msra.mxu0 %v743
      %901 = vmatpush.msra.mxu0 %v741
      %902 = vmatpush.msra.mxu0 %v739
      %903 = vmatpush.msra.mxu0 %v737
      %904 = vmatpush.msra.mxu0 %v735
      %905 = vmatpush.msra.mxu0 %v733
      %906 = vmatmul.f32.gmra.mxu0 %v761
      %v907 = vpop.f32.mrf.mxu0
      %v908 = vadd.f32 %v888, %v907
      %909 = vdwg.mxu0
      %910 = vmatpush.msra.mxu0 %v572
      %911 = vmatpush.msra.mxu0 %v570
      %912 = vmatpush.msra.mxu0 %v568
      %913 = vmatpush.msra.mxu0 %v566
      %914 = vmatpush.msra.mxu0 %v564
      %915 = vmatpush.msra.mxu0 %v562
      %916 = vmatpush.msra.mxu0 %v560
      %917 = vmatpush.msra.mxu0 %v558
      %918 = vmatpush.msra.mxu0 %v556
      %919 = vmatpush.msra.mxu0 %v554
      %920 = vmatpush.msra.mxu0 %v552
      %921 = vmatpush.msra.mxu0 %v550
      %922 = vmatpush.msra.mxu0 %v548
      %923 = vmatpush.msra.mxu0 %v546
      %924 = vmatpush.msra.mxu0 %v544
      %925 = vmatpush.msra.mxu0 %v542
      %926 = vmatmul.f32.gmra.mxu0 %v534
      %v927 = vpop.f32.mrf.mxu0
      %v928 = vadd.f32 0.0, %v927
      %929 = vdwg.mxu0
      %930 = vmatpush.msra.mxu0 %v604
      %931 = vmatpush.msra.mxu0 %v602
      %932 = vmatpush.msra.mxu0 %v600
      %933 = vmatpush.msra.mxu0 %v598
      %934 = vmatpush.msra.mxu0 %v596
      %935 = vmatpush.msra.mxu0 %v594
      %936 = vmatpush.msra.mxu0 %v592
      %937 = vmatpush.msra.mxu0 %v590
      %938 = vmatpush.msra.mxu0 %v588
      %939 = vmatpush.msra.mxu0 %v586
      %940 = vmatpush.msra.mxu0 %v584
      %941 = vmatpush.msra.mxu0 %v582
      %942 = vmatpush.msra.mxu0 %v580
      %943 = vmatpush.msra.mxu0 %v578
      %944 = vmatpush.msra.mxu0 %v576
      %945 = vmatpush.msra.mxu0 %v574
      %946 = vmatmul.f32.gmra.mxu0 %v535
      %v947 = vpop.f32.mrf.mxu0
      %v948 = vadd.f32 %v928, %v947
      %949 = vdwg.mxu0
      %950 = vmatpush.msra.mxu0 %v636
      %951 = vmatpush.msra.mxu0 %v634
      %952 = vmatpush.msra.mxu0 %v632
      %953 = vmatpush.msra.mxu0 %v630
      %954 = vmatpush.msra.mxu0 %v628
      %955 = vmatpush.msra.mxu0 %v626
      %956 = vmatpush.msra.mxu0 %v624
      %957 = vmatpush.msra.mxu0 %v622
      %958 = vmatpush.msra.mxu0 %v620
      %959 = vmatpush.msra.mxu0 %v618
      %960 = vmatpush.msra.mxu0 %v616
      %961 = vmatpush.msra.mxu0 %v614
      %962 = vmatpush.msra.mxu0 %v612
      %963 = vmatpush.msra.mxu0 %v610
      %964 = vmatpush.msra.mxu0 %v608
      %965 = vmatpush.msra.mxu0 %v606
      %966 = vmatmul.f32.gmra.mxu0 %v536
      %v967 = vpop.f32.mrf.mxu0
      %v968 = vadd.f32 %v948, %v967
      %969 = vdwg.mxu0
      %970 = vmatpush.msra.mxu0 %v668
      %971 = vmatpush.msra.mxu0 %v666
      %972 = vmatpush.msra.mxu0 %v664
      %973 = vmatpush.msra.mxu0 %v662
      %974 = vmatpush.msra.mxu0 %v660
      %975 = vmatpush.msra.mxu0 %v658
      %976 = vmatpush.msra.mxu0 %v656
      %977 = vmatpush.msra.mxu0 %v654
      %978 = vmatpush.msra.mxu0 %v652
      %979 = vmatpush.msra.mxu0 %v650
      %980 = vmatpush.msra.mxu0 %v648
      %981 = vmatpush.msra.mxu0 %v646
      %982 = vmatpush.msra.mxu0 %v644
      %983 = vmatpush.msra.mxu0 %v642
      %984 = vmatpush.msra.mxu0 %v640
      %985 = vmatpush.msra.mxu0 %v638
      %986 = vmatmul.f32.gmra.mxu0 %v537
      %v987 = vpop.f32.mrf.mxu0
      %v988 = vadd.f32 %v968, %v987
      %989 = vdwg.mxu0
      %990 = vmatpush.msra.mxu0 %v700
      %991 = vmatpush.msra.mxu0 %v698
      %992 = vmatpush.msra.mxu0 %v696
      %993 = vmatpush.msra.mxu0 %v694
      %994 = vmatpush.msra.mxu0 %v692
      %995 = vmatpush.msra.mxu0 %v690
      %996 = vmatpush.msra.mxu0 %v688
      %997 = vmatpush.msra.mxu0 %v686
      %998 = vmatpush.msra.mxu0 %v684
      %999 = vmatpush.msra.mxu0 %v682
      %1000 = vmatpush.msra.mxu0 %v680
      %1001 = vmatpush.msra.mxu0 %v678
      %1002 = vmatpush.msra.mxu0 %v676
      %1003 = vmatpush.msra.mxu0 %v674
      %1004 = vmatpush.msra.mxu0 %v672
      %1005 = vmatpush.msra.mxu0 %v670
      %1006 = vmatmul.f32.gmra.mxu0 %v538
      %v1007 = vpop.f32.mrf.mxu0
      %v1008 = vadd.f32 %v988, %v1007
      %1009 = vdwg.mxu0
      %1010 = vmatpush.msra.mxu0 %v732
      %1011 = vmatpush.msra.mxu0 %v730
      %1012 = vmatpush.msra.mxu0 %v728
      %1013 = vmatpush.msra.mxu0 %v726
      %1014 = vmatpush.msra.mxu0 %v724
      %1015 = vmatpush.msra.mxu0 %v722
      %1016 = vmatpush.msra.mxu0 %v720
      %1017 = vmatpush.msra.mxu0 %v718
      %1018 = vmatpush.msra.mxu0 %v716
      %1019 = vmatpush.msra.mxu0 %v714
      %1020 = vmatpush.msra.mxu0 %v712
      %1021 = vmatpush.msra.mxu0 %v710
      %1022 = vmatpush.msra.mxu0 %v708
      %1023 = vmatpush.msra.mxu0 %v706
      %1024 = vmatpush.msra.mxu0 %v704
      %1025 = vmatpush.msra.mxu0 %v702
      %1026 = vmatmul.f32.gmra.mxu0 %v539
      %v1027 = vpop.f32.mrf.mxu0
      %v1028 = vadd.f32 %v1008, %v1027
      %1029 = vdwg.mxu0
      %1030 = vmatpush.msra.mxu0 0.0
      %1031 = vmatpush.msra.mxu0 0.0
      %1032 = vmatpush.msra.mxu0 0.0
      %1033 = vmatpush.msra.mxu0 %v768
      %1034 = vmatpush.msra.mxu0 %v756
      %1035 = vmatpush.msra.mxu0 %v754
      %1036 = vmatpush.msra.mxu0 %v752
      %1037 = vmatpush.msra.mxu0 %v750
      %1038 = vmatpush.msra.mxu0 %v748
      %1039 = vmatpush.msra.mxu0 %v746
      %1040 = vmatpush.msra.mxu0 %v744
      %1041 = vmatpush.msra.mxu0 %v742
      %1042 = vmatpush.msra.mxu0 %v740
      %1043 = vmatpush.msra.mxu0 %v738
      %1044 = vmatpush.msra.mxu0 %v736
      %1045 = vmatpush.msra.mxu0 %v734
      %1046 = vmatmul.f32.gmra.mxu0 %v761
      %v1047 = vpop.f32.mrf.mxu0
      %v1048 = vadd.f32 %v1028, %v1047
      %1049 = vdwg.mxu0
      %1052 = vrot.lane.b32.xlu0 %v908, 127
      %v1053 = vpop.permute.xlu0 %1052
      %1054 = vrot.lane.b32.xlu0 %v1048, 127
      %v1055 = vpop.permute.xlu0 %1054
      %v1056 = vsel %vm520, %v1053, %v1055
      %1059 = vrot.lane.b32.xlu0 %v908, 126
      %v1060 = vpop.permute.xlu0 %1059
      %1061 = vrot.lane.b32.xlu0 %v1048, 126
      %v1062 = vpop.permute.xlu0 %1061
      %vm1063 = vcmask 1031168
      %v1064 = vsel %vm1063, %v1060, %v1062
      %1067 = vrot.lane.b32.xlu0 %v908, 125
      %v1068 = vpop.permute.xlu0 %1067
      %1069 = vrot.lane.b32.xlu0 %v1048, 125
      %v1070 = vpop.permute.xlu0 %1069
      %vm1071 = vcmask 1022976
      %v1072 = vsel %vm1071, %v1068, %v1070
      %1075 = vrot.lane.b32.xlu0 %v908, 124
      %v1076 = vpop.permute.xlu0 %1075
      %1077 = vrot.lane.b32.xlu0 %v1048, 124
      %v1078 = vpop.permute.xlu0 %1077
      %vm1079 = vcmask 1014784
      %v1080 = vsel %vm1079, %v1076, %v1078
      %1083 = vrot.lane.b32.xlu0 %v908, 113
      %v1084 = vpop.permute.xlu0 %1083
      %1085 = vrot.lane.b32.xlu0 %v1048, 113
      %v1086 = vpop.permute.xlu0 %1085
      %vm1087 = vcmask 924672
      %v1088 = vsel %vm1087, %v1084, %v1086
      %1091 = vrot.lane.b32.xlu0 %v908, 112
      %v1092 = vpop.permute.xlu0 %1091
      %1093 = vrot.lane.b32.xlu0 %v1048, 112
      %v1094 = vpop.permute.xlu0 %1093
      %vm1095 = vcmask 916480
      %v1096 = vsel %vm1095, %v1092, %v1094
      %1099 = vrot.lane.b32.xlu0 %v908, 111
      %v1100 = vpop.permute.xlu0 %1099
      %1101 = vrot.lane.b32.xlu0 %v1048, 111
      %v1102 = vpop.permute.xlu0 %1101
      %vm1103 = vcmask 908288
      %v1104 = vsel %vm1103, %v1100, %v1102
      %1107 = vrot.lane.b32.xlu0 %v908, 110
      %v1108 = vpop.permute.xlu0 %1107
      %1109 = vrot.lane.b32.xlu0 %v1048, 110
      %v1110 = vpop.permute.xlu0 %1109
      %vm1111 = vcmask 900096
      %v1112 = vsel %vm1111, %v1108, %v1110
      %1115 = vrot.lane.b32.xlu0 %v908, 109
      %v1116 = vpop.permute.xlu0 %1115
      %1117 = vrot.lane.b32.xlu0 %v1048, 109
      %v1118 = vpop.permute.xlu0 %1117
      %vm1119 = vcmask 891904
      %v1120 = vsel %vm1119, %v1116, %v1118
      %1123 = vrot.lane.b32.xlu0 %v908, 98
      %v1124 = vpop.permute.xlu0 %1123
      %1125 = vrot.lane.b32.xlu0 %v1048, 98
      %v1126 = vpop.permute.xlu0 %1125
      %v1127 = vsel %vm477, %v1124, %v1126
      %1130 = vrot.lane.b32.xlu0 %v908, 97
      %v1131 = vpop.permute.xlu0 %1130
      %1132 = vrot.lane.b32.xlu0 %v1048, 97
      %v1133 = vpop.permute.xlu0 %1132
      %vm1134 = vcmask 793600
      %v1135 = vsel %vm1134, %v1131, %v1133
      %1138 = vrot.lane.b32.xlu0 %v908, 96
      %v1139 = vpop.permute.xlu0 %1138
      %1140 = vrot.lane.b32.xlu0 %v1048, 96
      %v1141 = vpop.permute.xlu0 %1140
      %vm1142 = vcmask 785408
      %v1143 = vsel %vm1142, %v1139, %v1141
      %1146 = vrot.lane.b32.xlu0 %v908, 95
      %v1147 = vpop.permute.xlu0 %1146
      %1148 = vrot.lane.b32.xlu0 %v1048, 95
      %v1149 = vpop.permute.xlu0 %1148
      %vm1150 = vcmask 777216
      %v1151 = vsel %vm1150, %v1147, %v1149
      %1154 = vrot.lane.b32.xlu0 %v908, 94
      %v1155 = vpop.permute.xlu0 %1154
      %1156 = vrot.lane.b32.xlu0 %v1048, 94
      %v1157 = vpop.permute.xlu0 %1156
      %vm1158 = vcmask 769024
      %v1159 = vsel %vm1158, %v1155, %v1157
      %1162 = vrot.lane.b32.xlu0 %v908, 83
      %v1163 = vpop.permute.xlu0 %1162
      %1164 = vrot.lane.b32.xlu0 %v1048, 83
      %v1165 = vpop.permute.xlu0 %1164
      %vm1166 = vcmask 678912
      %v1167 = vsel %vm1166, %v1163, %v1165
      %1170 = vrot.lane.b32.xlu0 %v908, 114
      %v1171 = vpop.permute.xlu0 %1170
      %1172 = vrot.lane.b32.xlu0 %v1048, 114
      %v1173 = vpop.permute.xlu0 %1172
      %vm1174 = vcmask 932864
      %v1175 = vsel %vm1174, %v1171, %v1173
      %1176 = vrot.lane.b32.xlu0 %v908, 82
      %v1177 = vpop.permute.xlu0 %1176
      %1178 = vrot.lane.b32.xlu0 %v1048, 82
      %v1179 = vpop.permute.xlu0 %1178
      %1180 = vrot.lane.b32.xlu0 %v1056, 82
      %v1181 = vpop.permute.xlu0 %1180
      %1182 = vrot.lane.b32.xlu0 %v1055, 82
      %v1183 = vpop.permute.xlu0 %1182
      %1184 = vrot.lane.b32.xlu0 %v1064, 82
      %v1185 = vpop.permute.xlu0 %1184
      %1186 = vrot.lane.b32.xlu0 %v1062, 82
      %v1187 = vpop.permute.xlu0 %1186
      %1188 = vrot.lane.b32.xlu0 %v1072, 82
      %v1189 = vpop.permute.xlu0 %1188
      %1190 = vrot.lane.b32.xlu0 %v1070, 82
      %v1191 = vpop.permute.xlu0 %1190
      %1192 = vrot.lane.b32.xlu0 %v1175, 82
      %v1193 = vpop.permute.xlu0 %1192
      %1194 = vrot.lane.b32.xlu0 %v1173, 82
      %v1195 = vpop.permute.xlu0 %1194
      %1196 = vrot.lane.b32.xlu0 %v1088, 82
      %v1197 = vpop.permute.xlu0 %1196
      %1198 = vrot.lane.b32.xlu0 %v1086, 82
      %v1199 = vpop.permute.xlu0 %1198
      %1200 = vrot.lane.b32.xlu0 %v1096, 82
      %v1201 = vpop.permute.xlu0 %1200
      %1202 = vrot.lane.b32.xlu0 %v1094, 82
      %v1203 = vpop.permute.xlu0 %1202
      %1204 = vrot.lane.b32.xlu0 %v1104, 82
      %v1205 = vpop.permute.xlu0 %1204
      %1206 = vrot.lane.b32.xlu0 %v1102, 82
      %v1207 = vpop.permute.xlu0 %1206
      %1208 = vrot.lane.b32.xlu0 %v1112, 82
      %v1209 = vpop.permute.xlu0 %1208
      %1210 = vrot.lane.b32.xlu0 %v1110, 82
      %v1211 = vpop.permute.xlu0 %1210
      %vm1212 = vcmask 670720
      %v1213 = vsel %vm1212, %v1177, %v1179
      %v1214 = vsel %vm1212, %v1181, %v1183
      %v1215 = vsel %vm1212, %v1185, %v1187
      %v1216 = vsel %vm1212, %v1189, %v1191
      %v1217 = vsel %vm1212, %v1193, %v1195
      %v1218 = vsel %vm1212, %v1197, %v1199
      %v1219 = vsel %vm1212, %v1201, %v1203
      %v1220 = vsel %vm1212, %v1205, %v1207
      %v1221 = vsel %vm1212, %v1209, %v1211
      %v1240 = vld [vmem:[%s2] sm:$0xff]
      %v1241 = vld [vmem:[%s2 + $0x8] sm:$0xff]
      %vm1242 = vcmask 588800
      %v1244 = vsel %vm1242, %v1241, 0
      %1246 = vmatpush.msra.mxu0 %v1167
      %1247 = vmatpush.msra.mxu0 %v1159
      %1248 = vmatpush.msra.mxu0 %v1151
      %1249 = vmatpush.msra.mxu0 %v1143
      %1250 = vmatpush.msra.mxu0 %v1135
      %1251 = vmatpush.msra.mxu0 %v1127
      %1252 = vmatpush.msra.mxu0 %v1120
      %1253 = vmatpush.msra.mxu0 %v1112
      %1254 = vmatpush.msra.mxu0 %v1104
      %1255 = vmatpush.msra.mxu0 %v1096
      %1256 = vmatpush.msra.mxu0 %v1088
      %1257 = vmatpush.msra.mxu0 %v1080
      %1258 = vmatpush.msra.mxu0 %v1072
      %1259 = vmatpush.msra.mxu0 %v1064
      %1260 = vmatpush.msra.mxu0 %v1056
      %1261 = vmatpush.msra.mxu0 %v908
      %1262 = vmatmul.f32.gmra.mxu0 %v1240
      %v1263 = vpop.f32.mrf.mxu0
      %v1264 = vadd.f32 0.0, %v1263
      %1265 = vdwg.mxu0
      %1266 = vmatpush.msra.mxu0 0.0
      %1267 = vmatpush.msra.mxu0 0.0
      %1268 = vmatpush.msra.mxu0 0.0
      %1269 = vmatpush.msra.mxu0 0.0
      %1270 = vmatpush.msra.mxu0 0.0
      %1271 = vmatpush.msra.mxu0 0.0
      %1272 = vmatpush.msra.mxu0 0.0
      %1273 = vmatpush.msra.mxu0 %v1221
      %1274 = vmatpush.msra.mxu0 %v1220
      %1275 = vmatpush.msra.mxu0 %v1219
      %1276 = vmatpush.msra.mxu0 %v1218
      %1277 = vmatpush.msra.mxu0 %v1217
      %1278 = vmatpush.msra.mxu0 %v1216
      %1279 = vmatpush.msra.mxu0 %v1215
      %1280 = vmatpush.msra.mxu0 %v1214
      %1281 = vmatpush.msra.mxu0 %v1213
      %1282 = vmatmul.f32.gmra.mxu0 %v1244
      %v1283 = vpop.f32.mrf.mxu0
      %v1284 = vadd.f32 %v1264, %v1283
      %1285 = vdwg.mxu0
      %1286 = vmatpush.msra.mxu0 %v1165
      %1287 = vmatpush.msra.mxu0 %v1157
      %1288 = vmatpush.msra.mxu0 %v1149
      %1289 = vmatpush.msra.mxu0 %v1141
      %1290 = vmatpush.msra.mxu0 %v1133
      %1291 = vmatpush.msra.mxu0 %v1126
      %1292 = vmatpush.msra.mxu0 %v1118
      %1293 = vmatpush.msra.mxu0 %v1110
      %1294 = vmatpush.msra.mxu0 %v1102
      %1295 = vmatpush.msra.mxu0 %v1094
      %1296 = vmatpush.msra.mxu0 %v1086
      %1297 = vmatpush.msra.mxu0 %v1078
      %1298 = vmatpush.msra.mxu0 %v1070
      %1299 = vmatpush.msra.mxu0 %v1062
      %1300 = vmatpush.msra.mxu0 %v1055
      %1301 = vmatpush.msra.mxu0 %v1048
      %1302 = vmatmul.f32.gmra.mxu0 %v1240
      %v1303 = vpop.f32.mrf.mxu0
      %v1304 = vadd.f32 0.0, %v1303
      %1305 = vdwg.mxu0
      %1306 = vmatpush.msra.mxu0 0.0
      %1307 = vmatpush.msra.mxu0 0.0
      %1308 = vmatpush.msra.mxu0 0.0
      %1309 = vmatpush.msra.mxu0 0.0
      %1310 = vmatpush.msra.mxu0 0.0
      %1311 = vmatpush.msra.mxu0 0.0
      %1312 = vmatpush.msra.mxu0 0.0
      %1313 = vmatpush.msra.mxu0 %v1211
      %1314 = vmatpush.msra.mxu0 %v1207
      %1315 = vmatpush.msra.mxu0 %v1203
      %1316 = vmatpush.msra.mxu0 %v1199
      %1317 = vmatpush.msra.mxu0 %v1195
      %1318 = vmatpush.msra.mxu0 %v1191
      %1319 = vmatpush.msra.mxu0 %v1187
      %1320 = vmatpush.msra.mxu0 %v1183
      %1321 = vmatpush.msra.mxu0 %v1179
      %1322 = vmatmul.f32.gmra.mxu0 %v1244
      %v1323 = vpop.f32.mrf.mxu0
      %v1324 = vadd.f32 %v1304, %v1323
      %1325 = vdwg.mxu0
      %v1326 = vtanh.pop %v1284
      %v1327 = vtanh.pop %v1324
      %1330 = vrot.lane.b32.xlu0 %v1326, 126
      %v1331 = vpop.permute.xlu0 %1330
      %1332 = vrot.lane.b32.xlu0 %v1327, 126
      %v1333 = vpop.permute.xlu0 %1332
      %v1334 = vsel %vm1063, %v1331, %v1333
      %v1337 = vmax.f32 %v1326, %v1334
      %v1338 = vmax.f32 %v1327, %v1333
      %1341 = vrot.lane.b32.xlu0 %v1337, 98
      %v1342 = vpop.permute.xlu0 %1341
      %1343 = vrot.lane.b32.xlu0 %v1338, 98
      %v1344 = vpop.permute.xlu0 %1343
      %v1345 = vsel %vm477, %v1342, %v1344
      %v1348 = vmax.f32 %v1337, %v1345
      %v1349 = vmax.f32 %v1338, %v1344
      %v1350 = vld [vmem:[%s4] sm:$0xff]
      %v1351 = vld [vmem:[%s4 + $0x8] sm:$0xff]
      %v1352 = vld [vmem:[%s4 + $0x10] sm:$0xff]
      %v1353 = vld [vmem:[%s4 + $0x18] sm:$0xff]
      %v1354 = vld [vmem:[%s4 + $0x20] sm:$0xff]
      %v1355 = vld [vmem:[%s4 + $0x28] sm:$0xff]
      %v1356 = vld [vmem:[%s4 + $0x30] sm:$0xff]
      %v1357 = vld [vmem:[%s4 + $0x38] sm:$0xff]
      %v1358 = vld [vmem:[%s4 + $0x40] sm:$0xff]
      %v1359 = vld [vmem:[%s4 + $0x48] sm:$0xff]
      %v1360 = vld [vmem:[%s4 + $0x50] sm:$0xff]
      %v1361 = vld [vmem:[%s4 + $0x58] sm:$0xff]
      %v1362 = vld [vmem:[%s4 + $0x60] sm:$0xff]
      %v1363 = vld [vmem:[%s4 + $0x68] sm:$0xff]
      %v1364 = vld [vmem:[%s4 + $0x70] sm:$0xff]
      %v1365 = vld [vmem:[%s4 + $0x78] sm:$0xff]
      %v1366 = vld [vmem:[%s4 + $0x80] sm:$0x1]
      %vm1367 = vcmask 7168
      %v1369 = vsel %vm1367, %v1349, 0
      %vm1371 = vcmask 1040384
      %v1373 = vsel %vm1371, %v1366, 0
      %1375 = vmatpush.msra.mxu0 %v1365
      %1376 = vmatpush.msra.mxu0 %v1364
      %1377 = vmatpush.msra.mxu0 %v1363
      %1378 = vmatpush.msra.mxu0 %v1362
      %1379 = vmatpush.msra.mxu0 %v1361
      %1380 = vmatpush.msra.mxu0 %v1360
      %1381 = vmatpush.msra.mxu0 %v1359
      %1382 = vmatpush.msra.mxu0 %v1358
      %1383 = vmatpush.msra.mxu0 %v1357
      %1384 = vmatpush.msra.mxu0 %v1356
      %1385 = vmatpush.msra.mxu0 %v1355
      %1386 = vmatpush.msra.mxu0 %v1354
      %1387 = vmatpush.msra.mxu0 %v1353
      %1388 = vmatpush.msra.mxu0 %v1352
      %1389 = vmatpush.msra.mxu0 %v1351
      %1390 = vmatpush.msra.mxu0 %v1350
      %1391 = vmatmul.f32.gmra.mxu0 %v1348
      %v1392 = vpop.f32.mrf.mxu0
      %v1393 = vadd.f32 0.0, %v1392
      %1394 = vdwg.mxu0
      %1395 = vmatpush.msra.mxu0 0.0
      %1396 = vmatpush.msra.mxu0 0.0
      %1397 = vmatpush.msra.mxu0 0.0
      %1398 = vmatpush.msra.mxu0 0.0
      %1399 = vmatpush.msra.mxu0 0.0
      %1400 = vmatpush.msra.mxu0 0.0
      %1401 = vmatpush.msra.mxu0 0.0
      %1402 = vmatpush.msra.mxu0 0.0
      %1403 = vmatpush.msra.mxu0 0.0
      %1404 = vmatpush.msra.mxu0 0.0
      %1405 = vmatpush.msra.mxu0 0.0
      %1406 = vmatpush.msra.mxu0 0.0
      %1407 = vmatpush.msra.mxu0 0.0
      %1408 = vmatpush.msra.mxu0 0.0
      %1409 = vmatpush.msra.mxu0 0.0
      %1410 = vmatpush.msra.mxu0 %v1373
      %1411 = vmatmul.f32.gmra.mxu0 %v1369
      %v1412 = vpop.f32.mrf.mxu0
      %v1413 = vadd.f32 %v1393, %v1412
      %1414 = vdwg.mxu0
      %vm1415 = vcmask 72704
      %1416 = vst.msk [vmem:[%s222] sm:$0xff] %vm1415, %v1413
      %p1417 = scmp.lt.s32.totalorder %s16, 1
      %s1418 = scalar_select %p1417, %s16, 1
      %s1419 = smul.addr %s1418, 8
      %s1420 = scalar_lea.vmem %s5, %s1419
      // Predicated region
      $region41: #{cnn_forward.1} parent=39 // pred_check
        %p1421 = pneg %p144
      $region42: #{cnn_forward.1} parent=39 // pred_check_branch
        %1423 = sbr.rel (%p1421) target = $region44
      $region43: #{cnn_forward.1} parent=39 // pred_region
        _
      $region44: #{cnn_forward.1} parent=39 // pred_fallthru
        _
    $region40: #{cnn_forward.1} parent=5 // pred_fallthru
      _
    %p1424 = scmp.le.s32.totalorder 2, %s11
    // Predicated region
    $region45: #{cnn_forward.1} parent=5 // pred_check
      %p1425 = pneg %p1424
    $region46: #{cnn_forward.1} parent=5 // pred_check_branch
      %1427 = sbr.rel (%p1425) target = $region48
    $region47: #{cnn_forward.1} parent=5 // pred_region
      %s1428 = ssub.s32 %s11, 2
      // Predicated region
      $region49: #{cnn_forward.1} parent=47 // pred_check
        %p1429 = pneg %p150
      $region50: #{cnn_forward.1} parent=47 // pred_check_branch
        %1431 = sbr.rel (%p1429) target = $region52
      $region51: #{cnn_forward.1} parent=47 // pred_region
        %p1432 = scmp.lt.s32.totalorder %s17, 1
        %s1433 = scalar_select %p1432, %s17, 1
        %s1434 = smul.addr %s1433, 8
        %s1435 = scalar_lea.vmem %s5, %s1434
      $region52: #{cnn_forward.1} parent=47 // pred_fallthru
        _
    $region48: #{cnn_forward.1} parent=5 // pred_fallthru
      _
  $region6: #{cnn_forward.1} parent=0 // loop_footer
    %s15 = sadd.s32 1, %s11
  $region7: #{cnn_forward.1} parent=0 // loop_footer_branch
    %10 = sbr.rel target = $region3
  $region8: #{cnn_forward.1} parent=0 // loop_exit
    _

</llo_original>
